<compile_context>
chip_gen: v7x
topology: tpu7x:2x2x1
jax: 0.10.0
libtpu: 0.0.40
codegen_flags: <defaults>
</compile_context>

<pallas_src>
import math

import jax
import jax.numpy as jnp
import numpy as np
from jax.experimental import pallas as pl
from jax.experimental.pallas import tpu as pltpu


NEG_BIG = -1e30  # padded logit lanes: exp() underflows to exactly 0 in f32


def make_vae_kernel(inv_tau, low, high):
    def kernel(x_ref, g_ref,
               w1_ref, b1_ref, w2_ref, b2_ref,
               w3_ref, b3_ref, w4_ref, b4_ref,
               recon_ref, logits_ref):
        # ---- encoder: fc1 + relu + fc2 (bf16 MXU operands, f32 accum) ----
        x = x_ref[...].astype(jnp.bfloat16)
        h1 = jnp.dot(x, w1_ref[...], preferred_element_type=jnp.float32) + b1_ref[...]
        h1 = jnp.maximum(h1, 0.0)
        logits = (jnp.dot(h1.astype(jnp.bfloat16), w2_ref[...],
                          preferred_element_type=jnp.float32) + b2_ref[...])
        logits_ref[...] = logits                      # lane-dense (tile_b, Lp) store

        # ---- gumbel-softmax relaxation (training=True, nes=False path) ----
        # padded lanes carry -1e30 logits -> exp underflows to 0 -> prob 0.
        y = (logits + g_ref[...]) * inv_tau
        y = y - jnp.max(y, axis=-1, keepdims=True)
        e = jnp.exp(y)
        z = e * pl.reciprocal(jnp.sum(e, axis=-1, keepdims=True), approx=True)

        # ---- decoder: fc1 + relu + fc2 + sigmoid + clamp ----
        h2 = (jnp.dot(z.astype(jnp.bfloat16), w3_ref[...],
                      preferred_element_type=jnp.float32) + b3_ref[...])
        h2 = jnp.maximum(h2, 0.0)
        out = (jnp.dot(h2.astype(jnp.bfloat16), w4_ref[...],
                       preferred_element_type=jnp.float32) + b4_ref[...])
        out = jax.nn.sigmoid(out)
        recon_ref[...] = jnp.clip(out, low, high)

    return kernel


def prepare_params(params, latent_dim):
    """One-time parameter prep (kept OUT of the per-call forward path).

    - transpose (out, in) -> (in, out) so kernel computes x @ W directly,
    - cast matmul operands to bf16 (halves weight DMA; native MXU input),
    - biases to (1, out) f32 rows,
    - pad latent dim L -> Lp (multiple of 128) for lane-dense logits:
        enc_fc2: extra output columns = 0 weights, bias = -1e30
        dec_fc1: extra input rows     = 0 weights
      so softmax assigns the padded lanes exactly zero probability and the
      decoder ignores them.
    """
    w1, b1, w2, b2, w3, b3, w4, b4 = params
    L = latent_dim
    Lp = max(128, ((L + 127) // 128) * 128)

    w1t = w1.T.astype(jnp.bfloat16)                     # (D, H)
    w2t = w2.T.astype(jnp.bfloat16)                     # (H, L)
    w3t = w3.T.astype(jnp.bfloat16)                     # (L, H)
    w4t = w4.T.astype(jnp.bfloat16)                     # (H, D)

    if Lp != L:
        w2t = jnp.pad(w2t, ((0, 0), (0, Lp - L)))       # zero output cols
        w3t = jnp.pad(w3t, ((0, Lp - L), (0, 0)))       # zero input rows
        b2r = jnp.full((1, Lp), NEG_BIG, jnp.float32)
        b2r = b2r.at[0, :L].set(b2.astype(jnp.float32))
    else:
        b2r = b2.astype(jnp.float32)[None, :]

    b1r = b1.astype(jnp.float32)[None, :]
    b3r = b3.astype(jnp.float32)[None, :]
    b4r = b4.astype(jnp.float32)[None, :]
    return (w1t, b1r, w2t, b2r, w3t, b3r, w4t, b4r), Lp


def _choose_tile_b(B, cap=256):
    """Batch tile: multiple of 8 when possible (8,128 rule), capped for VMEM,
    and >=2 grid steps when the batch allows it (keeps both v7x TCs busy)."""
    if B % 8 != 0:
        return B                       # 'block == full array' exemption
    tb = min(cap, B)
    tb -= tb % 8
    while B % tb != 0:
        tb -= 8
    if tb == B and B >= 16 and (B // 2) % 8 == 0:
        tb = B // 2
    return tb


def vae_forward(x_nchw, gumbels, prepped, Lp, *, latent_dim, tau=1.0,
                log_prob_bound=100.0, training=True):
    B = x_nchw.shape[0]
    x = x_nchw.reshape(B, -1).astype(jnp.float32)   # torch.flatten(x, start_dim=1)
    D = x.shape[1]
    L = latent_dim
    w1t, b1r, w2t, b2r, w3t, b3r, w4t, b4r = prepped
    H = w1t.shape[1]

    g = gumbels.reshape(B, L).astype(jnp.float32)
    if Lp != L:
        g = jnp.pad(g, ((0, 0), (0, Lp - L)))       # tiny; keeps add lane-aligned

    low = math.exp(-log_prob_bound) if training else 0.0
    high = 1.0 - low
    kernel = make_vae_kernel(1.0 / tau, low, high)

    tile_b = _choose_tile_b(B)
    grid = (B // tile_b,)
    const = lambda i: (0, 0)           # grid-invariant weights: DMA'd once,
                                       # stay resident in VMEM across tiles

    recon, logits_p = pl.pallas_call(
        kernel,
        out_shape=(jax.ShapeDtypeStruct((B, D), jnp.float32),
                   jax.ShapeDtypeStruct((B, Lp), jnp.float32)),
        grid=grid,
        in_specs=[
            pl.BlockSpec((tile_b, D), lambda i: (i, 0)),    # x
            pl.BlockSpec((tile_b, Lp), lambda i: (i, 0)),   # gumbels (padded)
            pl.BlockSpec((D, H), const),                    # enc_fc1.weight^T (bf16)
            pl.BlockSpec((1, H), const),                    # enc_fc1.bias
            pl.BlockSpec((H, Lp), const),                   # enc_fc2.weight^T (padded)
            pl.BlockSpec((1, Lp), const),                   # enc_fc2.bias (padded -1e30)
            pl.BlockSpec((Lp, H), const),                   # dec_fc1.weight^T (padded)
            pl.BlockSpec((1, H), const),                    # dec_fc1.bias
            pl.BlockSpec((H, D), const),                    # dec_fc2.weight^T (bf16)
            pl.BlockSpec((1, D), const),                    # dec_fc2.bias
        ],
        out_specs=(
            pl.BlockSpec((tile_b, D), lambda i: (i, 0)),    # reconstruction
            pl.BlockSpec((tile_b, Lp), lambda i: (i, 0)),   # padded logits
        ),
        compiler_params=pltpu.CompilerParams(
            dimension_semantics=("parallel",)),
    )(x, g, w1t, b1r, w2t, b2r, w3t, b3r, w4t, b4r)

    # torch: logits = self._encode(x).view(x.size(0), -1, self.latent_dim)
    logits = logits_p[:, :L]
    return recon, logits.reshape(B, -1, L)


if __name__ == "__main__":
    # small shapes consistent with the module's Linear stack
    B, C, Hs, Ws = 2, 4, 16, 16
    input_size = C * Hs * Ws          # 1024
    hidden_dim = 128
    latent_dim = 32
    tau = 1.0
    log_prob_bound = 100.0

    key = jax.random.PRNGKey(0)
    keys = jax.random.split(key, 10)

    def linear_init(kw, kb, fan_in, fan_out):
        # deterministic PyTorch-style uniform(-1/sqrt(fan_in), 1/sqrt(fan_in))
        bound = 1.0 / math.sqrt(fan_in)
        w = jax.random.uniform(kw, (fan_out, fan_in), jnp.float32, -bound, bound)
        b = jax.random.uniform(kb, (fan_out,), jnp.float32, -bound, bound)
        return w, b

    w1, b1 = linear_init(keys[0], keys[1], input_size, hidden_dim)
    w2, b2 = linear_init(keys[2], keys[3], hidden_dim, latent_dim)
    w3, b3 = linear_init(keys[4], keys[5], latent_dim, hidden_dim)
    w4, b4 = linear_init(keys[6], keys[7], hidden_dim, input_size)
    params = (w1, b1, w2, b2, w3, b3, w4, b4)

    # one-time prep: transpose/cast/pad the weights (outside the forward path)
    prepped, Lp = prepare_params(params, latent_dim)
    prepped = jax.block_until_ready(prepped)

    x = jax.random.uniform(keys[8], (B, C, Hs, Ws), jnp.float32)
    # Gumbel(0,1) sample, same shape as logits.view(B, -1, latent_dim)
    gumbels = jax.random.gumbel(keys[9], (B, 1, latent_dim), jnp.float32)

    recon, logits = vae_forward(x, gumbels, prepped, Lp, latent_dim=latent_dim,
                                tau=tau, log_prob_bound=log_prob_bound,
                                training=True)
    jax.block_until_ready((recon, logits))

    # pure-JAX f32 reference for correctness (kernel uses bf16 MXU operands,
    # so compare with a bf16-scale tolerance)
    xf = x.reshape(B, -1)
    h1 = jnp.maximum(xf @ w1.T + b1, 0.0)
    lg = h1 @ w2.T + b2
    z = jax.nn.softmax((lg + gumbels.reshape(B, latent_dim)) / tau, axis=-1)
    h2 = jnp.maximum(z @ w3.T + b3, 0.0)
    rec = jax.nn.sigmoid(h2 @ w4.T + b4)
    low = math.exp(-log_prob_bound)
    rec = jnp.clip(rec, low, 1.0 - low)

    assert recon.shape == (B, input_size)
    assert logits.shape == (B, 1, latent_dim)
    assert np.allclose(np.asarray(recon), np.asarray(rec), atol=3e-2), "recon mismatch"
    assert np.allclose(np.asarray(logits).reshape(B, latent_dim),
                       np.asarray(lg), atol=3e-2), "logits mismatch"
    print("KERNEL_OK")
</pallas_src>

<mosaic_0001>
module attributes {stable_mosaic.version = 11 : i64} {
  func.func @kernel(%arg0: i32, %arg1: memref<2x1024xf32, #tpu.memory_space<vmem>>, %arg2: memref<2x128xf32, #tpu.memory_space<vmem>>, %arg3: memref<1024x128xbf16, #tpu.memory_space<vmem>>, %arg4: memref<1x128xf32, #tpu.memory_space<vmem>>, %arg5: memref<128x128xbf16, #tpu.memory_space<vmem>>, %arg6: memref<1x128xf32, #tpu.memory_space<vmem>>, %arg7: memref<128x128xbf16, #tpu.memory_space<vmem>>, %arg8: memref<1x128xf32, #tpu.memory_space<vmem>>, %arg9: memref<128x1024xbf16, #tpu.memory_space<vmem>>, %arg10: memref<1x1024xf32, #tpu.memory_space<vmem>>, %arg11: memref<2x1024xf32, #tpu.memory_space<vmem>>, %arg12: memref<2x128xf32, #tpu.memory_space<vmem>>) attributes {dimension_semantics = [#tpu.dimension_semantics<parallel>], iteration_bounds = array<i64: 1>, scalar_prefetch = 0 : i64, scratch_operands = 0 : i64, tpu.core_type = #tpu.core_type<tc>, window_params = [{transform_indices = @transform_0, window_bounds = array<i64: 2, 1024>}, {transform_indices = @transform_1, window_bounds = array<i64: 2, 128>}, {pipeline_mode = #tpu.pipeline_mode<synchronous>, transform_indices = @transform_2, window_bounds = array<i64: 1024, 128>}, {pipeline_mode = #tpu.pipeline_mode<synchronous>, transform_indices = @transform_3, window_bounds = array<i64: 1, 128>}, {pipeline_mode = #tpu.pipeline_mode<synchronous>, transform_indices = @transform_4, window_bounds = array<i64: 128, 128>}, {pipeline_mode = #tpu.pipeline_mode<synchronous>, transform_indices = @transform_5, window_bounds = array<i64: 1, 128>}, {pipeline_mode = #tpu.pipeline_mode<synchronous>, transform_indices = @transform_6, window_bounds = array<i64: 128, 128>}, {pipeline_mode = #tpu.pipeline_mode<synchronous>, transform_indices = @transform_7, window_bounds = array<i64: 1, 128>}, {pipeline_mode = #tpu.pipeline_mode<synchronous>, transform_indices = @transform_8, window_bounds = array<i64: 128, 1024>}, {pipeline_mode = #tpu.pipeline_mode<synchronous>, transform_indices = @transform_9, window_bounds = array<i64: 1, 1024>}, {transform_indices = @transform_10, window_bounds = array<i64: 2, 1024>}, {transform_indices = @transform_11, window_bounds = array<i64: 2, 128>}]} {
    %c0 = arith.constant 0 : index
    %c0_0 = arith.constant 0 : index
    %0 = vector.load %arg1[%c0, %c0_0] : memref<2x1024xf32, #tpu.memory_space<vmem>>, vector<2x1024xf32>
    %1 = arith.truncf %0 : vector<2x1024xf32> to vector<2x1024xbf16>
    %c0_1 = arith.constant 0 : index
    %c0_2 = arith.constant 0 : index
    %2 = vector.load %arg3[%c0_1, %c0_2] : memref<1024x128xbf16, #tpu.memory_space<vmem>>, vector<1024x128xbf16>
    %cst = arith.constant dense<0.000000e+00> : vector<2x128xf32>
    %3 = tpu.matmul %1, %2, %cst {dimension_numbers = #tpu.dot_dimension_numbers<[1], [0], [0], [1], [0, 0, 1, 1], [], []>} : vector<2x1024xbf16>, vector<1024x128xbf16>, vector<2x128xf32> -> vector<2x128xf32>
    %c0_3 = arith.constant 0 : index
    %c0_4 = arith.constant 0 : index
    %4 = vector.load %arg4[%c0_3, %c0_4] : memref<1x128xf32, #tpu.memory_space<vmem>>, vector<1x128xf32>
    %5 = vector.broadcast %4 : vector<1x128xf32> to vector<2x128xf32>
    %6 = arith.addf %3, %5 : vector<2x128xf32>
    %cst_5 = arith.constant 0.000000e+00 : f32
    %7 = vector.broadcast %cst_5 : f32 to vector<2x128xf32>
    %8 = arith.maximumf %6, %7 : vector<2x128xf32>
    %9 = arith.truncf %8 : vector<2x128xf32> to vector<2x128xbf16>
    %c0_6 = arith.constant 0 : index
    %c0_7 = arith.constant 0 : index
    %10 = vector.load %arg5[%c0_6, %c0_7] : memref<128x128xbf16, #tpu.memory_space<vmem>>, vector<128x128xbf16>
    %cst_8 = arith.constant dense<0.000000e+00> : vector<2x128xf32>
    %11 = tpu.matmul %9, %10, %cst_8 {dimension_numbers = #tpu.dot_dimension_numbers<[1], [0], [0], [1], [0, 0, 1, 1], [], []>} : vector<2x128xbf16>, vector<128x128xbf16>, vector<2x128xf32> -> vector<2x128xf32>
    %c0_9 = arith.constant 0 : index
    %c0_10 = arith.constant 0 : index
    %12 = vector.load %arg6[%c0_9, %c0_10] : memref<1x128xf32, #tpu.memory_space<vmem>>, vector<1x128xf32>
    %13 = vector.broadcast %12 : vector<1x128xf32> to vector<2x128xf32>
    %14 = arith.addf %11, %13 : vector<2x128xf32>
    %c0_11 = arith.constant 0 : index
    %c0_12 = arith.constant 0 : index
    %15 = vector.load %arg12[%c0_11, %c0_12] : memref<2x128xf32, #tpu.memory_space<vmem>>, vector<2x128xf32>
    tpu.vector_store %arg12[%c0_11, %c0_12], %14 {strides = array<i32>} : memref<2x128xf32, #tpu.memory_space<vmem>>, vector<2x128xf32>,
    %c0_13 = arith.constant 0 : index
    %c0_14 = arith.constant 0 : index
    %16 = vector.load %arg2[%c0_13, %c0_14] : memref<2x128xf32, #tpu.memory_space<vmem>>, vector<2x128xf32>
    %17 = arith.addf %14, %16 : vector<2x128xf32>
    %cst_15 = arith.constant 1.000000e+00 : f32
    %18 = vector.broadcast %cst_15 : f32 to vector<2x128xf32>
    %19 = arith.mulf %17, %18 : vector<2x128xf32>
    %cst_16 = arith.constant dense<0xFF800000> : vector<2xf32>
    %20 = vector.multi_reduction <maximumf>, %19, %cst_16 [1] : vector<2x128xf32> to vector<2xf32>
    %21 = vector.shape_cast %20 : vector<2xf32> to vector<2x1xf32>
    %22 = vector.broadcast %21 : vector<2x1xf32> to vector<2x128xf32>
    %23 = arith.subf %19, %22 : vector<2x128xf32>
    %24 = math.exp %23 : vector<2x128xf32>
    %cst_17 = arith.constant dense<0.000000e+00> : vector<2xf32>
    %25 = vector.multi_reduction <add>, %24, %cst_17 [1] : vector<2x128xf32> to vector<2xf32>
    %26 = vector.shape_cast %25 : vector<2xf32> to vector<2x1xf32>
    %27 = tpu.reciprocal %26 {approx = true} : vector<2x1xf32> -> vector<2x1xf32>
    %28 = vector.broadcast %27 : vector<2x1xf32> to vector<2x128xf32>
    %29 = arith.mulf %24, %28 : vector<2x128xf32>
    %30 = arith.truncf %29 : vector<2x128xf32> to vector<2x128xbf16>
    %c0_18 = arith.constant 0 : index
    %c0_19 = arith.constant 0 : index
    %31 = vector.load %arg7[%c0_18, %c0_19] : memref<128x128xbf16, #tpu.memory_space<vmem>>, vector<128x128xbf16>
    %cst_20 = arith.constant dense<0.000000e+00> : vector<2x128xf32>
    %32 = tpu.matmul %30, %31, %cst_20 {dimension_numbers = #tpu.dot_dimension_numbers<[1], [0], [0], [1], [0, 0, 1, 1], [], []>} : vector<2x128xbf16>, vector<128x128xbf16>, vector<2x128xf32> -> vector<2x128xf32>
    %c0_21 = arith.constant 0 : index
    %c0_22 = arith.constant 0 : index
    %33 = vector.load %arg8[%c0_21, %c0_22] : memref<1x128xf32, #tpu.memory_space<vmem>>, vector<1x128xf32>
    %34 = vector.broadcast %33 : vector<1x128xf32> to vector<2x128xf32>
    %35 = arith.addf %32, %34 : vector<2x128xf32>
    %cst_23 = arith.constant 0.000000e+00 : f32
    %36 = vector.broadcast %cst_23 : f32 to vector<2x128xf32>
    %37 = arith.maximumf %35, %36 : vector<2x128xf32>
    %38 = arith.truncf %37 : vector<2x128xf32> to vector<2x128xbf16>
    %c0_24 = arith.constant 0 : index
    %c0_25 = arith.constant 0 : index
    %39 = vector.load %arg9[%c0_24, %c0_25] : memref<128x1024xbf16, #tpu.memory_space<vmem>>, vector<128x1024xbf16>
    %cst_26 = arith.constant dense<0.000000e+00> : vector<2x1024xf32>
    %40 = tpu.matmul %38, %39, %cst_26 {dimension_numbers = #tpu.dot_dimension_numbers<[1], [0], [0], [1], [0, 0, 1, 1], [], []>} : vector<2x128xbf16>, vector<128x1024xbf16>, vector<2x1024xf32> -> vector<2x1024xf32>
    %c0_27 = arith.constant 0 : index
    %c0_28 = arith.constant 0 : index
    %41 = vector.load %arg10[%c0_27, %c0_28] : memref<1x1024xf32, #tpu.memory_space<vmem>>, vector<1x1024xf32>
    %42 = vector.broadcast %41 : vector<1x1024xf32> to vector<2x1024xf32>
    %43 = arith.addf %40, %42 : vector<2x1024xf32>
    %44 = arith.negf %43 : vector<2x1024xf32>
    %45 = math.exp %44 : vector<2x1024xf32>
    %cst_29 = arith.constant 1.000000e+00 : f32
    %46 = vector.broadcast %cst_29 : f32 to vector<2x1024xf32>
    %47 = arith.addf %46, %45 : vector<2x1024xf32>
    %48 = arith.divf %46, %47 : vector<2x1024xf32>
    %cst_30 = arith.constant 3.783510e-44 : f32
    %cst_31 = arith.constant 1.000000e+00 : f32
    %49 = vector.broadcast %cst_30 : f32 to vector<2x1024xf32>
    %50 = arith.maximumf %49, %48 : vector<2x1024xf32>
    %51 = vector.broadcast %cst_31 : f32 to vector<2x1024xf32>
    %52 = arith.minimumf %51, %50 : vector<2x1024xf32>
    %c0_32 = arith.constant 0 : index
    %c0_33 = arith.constant 0 : index
    %53 = vector.load %arg11[%c0_32, %c0_33] : memref<2x1024xf32, #tpu.memory_space<vmem>>, vector<2x1024xf32>
    tpu.vector_store %arg11[%c0_32, %c0_33], %52 {strides = array<i32>} : memref<2x1024xf32, #tpu.memory_space<vmem>>, vector<2x1024xf32>,
    return
  }
  func.func @transform_0(%arg0: i32) -> (i32, i32) {
    %c0_i32 = arith.constant 0 : i32
    %c0_i32_0 = arith.constant 0 : i32
    return %arg0, %c0_i32 : i32, i32
  }
  func.func @transform_1(%arg0: i32) -> (i32, i32) {
    %c0_i32 = arith.constant 0 : i32
    %c0_i32_0 = arith.constant 0 : i32
    return %arg0, %c0_i32 : i32, i32
  }
  func.func @transform_2(%arg0: i32) -> (i32, i32) {
    %c0_i32 = arith.constant 0 : i32
    %c0_i32_0 = arith.constant 0 : i32
    %c0_i32_1 = arith.constant 0 : i32
    return %c0_i32, %c0_i32_0 : i32, i32
  }
  func.func @transform_3(%arg0: i32) -> (i32, i32) {
    %c0_i32 = arith.constant 0 : i32
    %c0_i32_0 = arith.constant 0 : i32
    %c0_i32_1 = arith.constant 0 : i32
    return %c0_i32, %c0_i32_0 : i32, i32
  }
  func.func @transform_4(%arg0: i32) -> (i32, i32) {
    %c0_i32 = arith.constant 0 : i32
    %c0_i32_0 = arith.constant 0 : i32
    %c0_i32_1 = arith.constant 0 : i32
    return %c0_i32, %c0_i32_0 : i32, i32
  }
  func.func @transform_5(%arg0: i32) -> (i32, i32) {
    %c0_i32 = arith.constant 0 : i32
    %c0_i32_0 = arith.constant 0 : i32
    %c0_i32_1 = arith.constant 0 : i32
    return %c0_i32, %c0_i32_0 : i32, i32
  }
  func.func @transform_6(%arg0: i32) -> (i32, i32) {
    %c0_i32 = arith.constant 0 : i32
    %c0_i32_0 = arith.constant 0 : i32
    %c0_i32_1 = arith.constant 0 : i32
    return %c0_i32, %c0_i32_0 : i32, i32
  }
  func.func @transform_7(%arg0: i32) -> (i32, i32) {
    %c0_i32 = arith.constant 0 : i32
    %c0_i32_0 = arith.constant 0 : i32
    %c0_i32_1 = arith.constant 0 : i32
    return %c0_i32, %c0_i32_0 : i32, i32
  }
  func.func @transform_8(%arg0: i32) -> (i32, i32) {
    %c0_i32 = arith.constant 0 : i32
    %c0_i32_0 = arith.constant 0 : i32
    %c0_i32_1 = arith.constant 0 : i32
    return %c0_i32, %c0_i32_0 : i32, i32
  }
  func.func @transform_9(%arg0: i32) -> (i32, i32) {
    %c0_i32 = arith.constant 0 : i32
    %c0_i32_0 = arith.constant 0 : i32
    %c0_i32_1 = arith.constant 0 : i32
    return %c0_i32, %c0_i32_0 : i32, i32
  }
  func.func @transform_10(%arg0: i32) -> (i32, i32) {
    %c0_i32 = arith.constant 0 : i32
    %c0_i32_0 = arith.constant 0 : i32
    return %arg0, %c0_i32 : i32, i32
  }
  func.func @transform_11(%arg0: i32) -> (i32, i32) {
    %c0_i32 = arith.constant 0 : i32
    %c0_i32_0 = arith.constant 0 : i32
    return %arg0, %c0_i32 : i32, i32
  }
}

</mosaic_0001>

<llo_original>
// kernel: tpu_custom_call.1
$region0: #{tpu_custom_call.1}
  #allocation0 [shape = 'u32[]', space=smem, size = 0x4, offset = 0x4, fixed_abs, tag = 'smem constant byte address 0x4 - core index']
  #allocation1 [shape = 'u32[144,128]{1,0:T(1,128)}', space=vmem, size = 0x12000, scoped, tag = 'internal scratch']
  %s0 = inlined_call_operand.hbm [shape: f32[2,1024], index: 0, kind: input, shape index: {}]
  %s1 = inlined_call_operand.vmem [shape: f32[2,128], index: 1, kind: input, shape index: {}]
  %s2 = inlined_call_operand.hbm [shape: bf16[1024,128], index: 2, kind: input, shape index: {}]
  %s3 = inlined_call_operand.vmem [shape: f32[1,128], index: 3, kind: input, shape index: {}]
  %s4 = inlined_call_operand.hbm [shape: bf16[128,128], index: 4, kind: input, shape index: {}]
  %s5 = inlined_call_operand.vmem [shape: f32[1,128], index: 5, kind: input, shape index: {}]
  %s6 = inlined_call_operand.hbm [shape: bf16[128,128], index: 6, kind: input, shape index: {}]
  %s7 = inlined_call_operand.vmem [shape: f32[1,128], index: 7, kind: input, shape index: {}]
  %s8 = inlined_call_operand.hbm [shape: bf16[128,1024], index: 8, kind: input, shape index: {}]
  %s9 = inlined_call_operand.vmem [shape: f32[1,1024], index: 9, kind: input, shape index: {}]
  %s10 = inlined_call_operand.hbm [shape: f32[2,1024], index: 10, kind: output, shape index: {0}]
  %s11 = inlined_call_operand.hbm [shape: f32[2,128], index: 11, kind: output, shape index: {1}]
  %12 = xla_tuple %s10, %s11
  %s13 = sld [smem:[#allocation0]]
  $region78: #{tpu_custom_call.1} parent=0
    _
  %s15 = ssub.s32 1, %s13
  %s16 = scalar_select 0, %s15, %s13
  $region1: #{tpu_custom_call.1} parent=0
    #allocation2 [shape = 'u8[8192]{0}', space=vmem, size = 0x2000, scoped, tag = 'input window, operand 0, single buffered']
    #allocation3 [shape = 's32[1]{0}', space=sflag, size = 0x4, scoped, tag = 'scoped memory for tpu_custom_call.1']
    #allocation4 [shape = 's32[1]{0}', space=sflag, size = 0x4, scoped, tag = 'scoped memory for tpu_custom_call.1']
    #allocation5 [shape = 'u8[262144]{0}', space=vmem, size = 0x40000, scoped, tag = 'input window, operand 2, single buffered']
    #allocation6 [shape = 's32[1]{0}', space=sflag, size = 0x4, scoped, tag = 'scoped memory for tpu_custom_call.1']
    #allocation7 [shape = 'u8[32768]{0}', space=vmem, size = 0x8000, scoped, tag = 'input window, operand 4, single buffered']
    #allocation8 [shape = 'u8[32768]{0}', space=vmem, size = 0x8000, scoped, tag = 'input window, operand 6, single buffered']
    #allocation9 [shape = 's32[1]{0}', space=sflag, size = 0x4, scoped, tag = 'scoped memory for tpu_custom_call.1']
    #allocation10 [shape = 'u8[262144]{0}', space=vmem, size = 0x40000, scoped, tag = 'input window, operand 8, single buffered']
    #allocation11 [shape = 'u8[8192]{0}', space=vmem, size = 0x2000, scoped, tag = 'output window, operand 0, single buffered']
    #allocation12 [shape = 'u8[1024]{0}', space=vmem, size = 0x400, scoped, tag = 'output window, operand 1, single buffered']
    #allocation13 [shape = 's32[1]{0}', space=sflag, size = 0x4, scoped, tag = 'scoped memory for tpu_custom_call.1']
    %17 = vsyncpa [#allocation3], 0
    %18 = vsyncpa [#allocation6], 0
    %19 = vsyncpa [#allocation9], 0
    %20 = vsyncpa [#allocation4], 0
    %21 = vsyncpa [#allocation13], 0
    // Predicated region
    $region2: #{tpu_custom_call.1} parent=1 // pred_check
      _
    $region3: #{tpu_custom_call.1} parent=1 // pred_check_branch
      %23 = sbr.rel (0) target = $region5
    $region4: #{tpu_custom_call.1} parent=1 // pred_region
      %s25 = ssub.s32 256, 256
      %26 = vsyncadd [#allocation3], %s25
      %s28 = sshll.u32 [#allocation2], 4
      %s29 = int_to_ptr.vmem [resolvable:$true] %s28
      %31 = dma.hbm_to_vmem [thread:$0]  %s0, 256, %s29, [#allocation3]
    $region5: #{tpu_custom_call.1} parent=1 // pred_fallthru
      _
    // Predicated region
    $region6: #{tpu_custom_call.1} parent=1 // pred_check
      _
    $region7: #{tpu_custom_call.1} parent=1 // pred_check_branch
      %33 = sbr.rel (0) target = $region9
    $region8: #{tpu_custom_call.1} parent=1 // pred_region
      _
    $region9: #{tpu_custom_call.1} parent=1 // pred_fallthru
      _
    // Predicated region
    $region10: #{tpu_custom_call.1} parent=1 // pred_check
      _
    $region11: #{tpu_custom_call.1} parent=1 // pred_check_branch
      %35 = sbr.rel (0) target = $region13
    $region12: #{tpu_custom_call.1} parent=1 // pred_region
      %s37 = ssub.s32 8192, 8192
      %38 = vsyncadd [#allocation6], %s37
      %s39 = sshll.u32 [#allocation5], 4
      %s40 = int_to_ptr.vmem [resolvable:$true] %s39
      %45 = dma.hbm_to_vmem [thread:$0]  %s2, 8192, %s40, [#allocation6], 64, 64, 4
    $region13: #{tpu_custom_call.1} parent=1 // pred_fallthru
      _
    // Predicated region
    $region14: #{tpu_custom_call.1} parent=1 // pred_check
      _
    $region15: #{tpu_custom_call.1} parent=1 // pred_check_branch
      %47 = sbr.rel (0) target = $region17
    $region16: #{tpu_custom_call.1} parent=1 // pred_region
      _
    $region17: #{tpu_custom_call.1} parent=1 // pred_fallthru
      _
    // Predicated region
    $region18: #{tpu_custom_call.1} parent=1 // pred_check
      _
    $region19: #{tpu_custom_call.1} parent=1 // pred_check_branch
      %49 = sbr.rel (0) target = $region21
    $region20: #{tpu_custom_call.1} parent=1 // pred_region
      %s51 = ssub.s32 1024, 1024
      %52 = vsyncadd [#allocation6], %s51
      %s53 = sshll.u32 [#allocation7], 4
      %s54 = int_to_ptr.vmem [resolvable:$true] %s53
      %59 = dma.hbm_to_vmem [thread:$0]  %s4, 1024, %s54, [#allocation6], 64, 64, 4
    $region21: #{tpu_custom_call.1} parent=1 // pred_fallthru
      _
    // Predicated region
    $region22: #{tpu_custom_call.1} parent=1 // pred_check
      _
    $region23: #{tpu_custom_call.1} parent=1 // pred_check_branch
      %61 = sbr.rel (0) target = $region25
    $region24: #{tpu_custom_call.1} parent=1 // pred_region
      _
    $region25: #{tpu_custom_call.1} parent=1 // pred_fallthru
      _
    // Predicated region
    $region26: #{tpu_custom_call.1} parent=1 // pred_check
      _
    $region27: #{tpu_custom_call.1} parent=1 // pred_check_branch
      %63 = sbr.rel (0) target = $region29
    $region28: #{tpu_custom_call.1} parent=1 // pred_region
      %s65 = ssub.s32 1024, 1024
      %66 = vsyncadd [#allocation9], %s65
      %s67 = sshll.u32 [#allocation8], 4
      %s68 = int_to_ptr.vmem [resolvable:$true] %s67
      %73 = dma.hbm_to_vmem [thread:$0]  %s6, 1024, %s68, [#allocation9], 64, 64, 4
    $region29: #{tpu_custom_call.1} parent=1 // pred_fallthru
      _
    // Predicated region
    $region30: #{tpu_custom_call.1} parent=1 // pred_check
      _
    $region31: #{tpu_custom_call.1} parent=1 // pred_check_branch
      %75 = sbr.rel (0) target = $region33
    $region32: #{tpu_custom_call.1} parent=1 // pred_region
      _
    $region33: #{tpu_custom_call.1} parent=1 // pred_fallthru
      _
    // Predicated region
    $region34: #{tpu_custom_call.1} parent=1 // pred_check
      _
    $region35: #{tpu_custom_call.1} parent=1 // pred_check_branch
      %77 = sbr.rel (0) target = $region37
    $region36: #{tpu_custom_call.1} parent=1 // pred_region
      %s79 = ssub.s32 8192, 8192
      %80 = vsyncadd [#allocation9], %s79
      %s81 = sshll.u32 [#allocation10], 4
      %s82 = int_to_ptr.vmem [resolvable:$true] %s81
      %87 = dma.hbm_to_vmem [thread:$0]  %s8, 8192, %s82, [#allocation9], 512, 512, 32
    $region37: #{tpu_custom_call.1} parent=1 // pred_fallthru
      _
    // Predicated region
    $region38: #{tpu_custom_call.1} parent=1 // pred_check
      _
    $region39: #{tpu_custom_call.1} parent=1 // pred_check_branch
      %89 = sbr.rel (0) target = $region41
    $region40: #{tpu_custom_call.1} parent=1 // pred_region
      _
    $region41: #{tpu_custom_call.1} parent=1 // pred_fallthru
      _
    // Predicated region
    $region42: #{tpu_custom_call.1} parent=1 // pred_check
      _
    $region43: #{tpu_custom_call.1} parent=1 // pred_check_branch
      %91 = sbr.rel (0) target = $region45
    $region44: #{tpu_custom_call.1} parent=1 // pred_region
      %92 = dma.done [#allocation3], 256
    $region45: #{tpu_custom_call.1} parent=1 // pred_fallthru
      _
    // Predicated region
    $region46: #{tpu_custom_call.1} parent=1 // pred_check
      _
    $region47: #{tpu_custom_call.1} parent=1 // pred_check_branch
      %94 = sbr.rel (0) target = $region49
    $region48: #{tpu_custom_call.1} parent=1 // pred_region
      %95 = dma.done [#allocation6], 8192
    $region49: #{tpu_custom_call.1} parent=1 // pred_fallthru
      _
    // Predicated region
    $region50: #{tpu_custom_call.1} parent=1 // pred_check
      _
    $region51: #{tpu_custom_call.1} parent=1 // pred_check_branch
      %97 = sbr.rel (0) target = $region53
    $region52: #{tpu_custom_call.1} parent=1 // pred_region
      %98 = dma.done [#allocation6], 1024
    $region53: #{tpu_custom_call.1} parent=1 // pred_fallthru
      _
    // Predicated region
    $region54: #{tpu_custom_call.1} parent=1 // pred_check
      _
    $region55: #{tpu_custom_call.1} parent=1 // pred_check_branch
      %100 = sbr.rel (0) target = $region57
    $region56: #{tpu_custom_call.1} parent=1 // pred_region
      %101 = dma.done [#allocation9], 1024
    $region57: #{tpu_custom_call.1} parent=1 // pred_fallthru
      _
    // Predicated region
    $region58: #{tpu_custom_call.1} parent=1 // pred_check
      _
    $region59: #{tpu_custom_call.1} parent=1 // pred_check_branch
      %103 = sbr.rel (0) target = $region61
    $region60: #{tpu_custom_call.1} parent=1 // pred_region
      %104 = dma.done [#allocation9], 8192
    $region61: #{tpu_custom_call.1} parent=1 // pred_fallthru
      _
    %v106 = vld [vmem:[#allocation2] sm:$0xff]
    %v107 = vld [vmem:[#allocation2 + $0x8] sm:$0xff]
    %v110 = vcombine.high %v106, %v106
    %v112 = vunpack.c.l.s4 1983009808
    %v113 = vunpack.c.0.s8 %v112
    %v114 = vlaneseq
    %v115 = vshrl.u32 %v114, 7
    %v116 = vsub.s32 %v113, %v115
    %v117 = vrot.slane %v106, %v116
    %v119 = vunpack.c.l.s4 1983009808
    %v120 = vunpack.c.0.s8 %v119
    %v121 = vlaneseq
    %v122 = vshrl.u32 %v121, 7
    %v123 = vsub.s32 %v120, %v122
    %v124 = vrot.slane %v110, %v123
    %v125 = vcombine.high %v117, %v117
    %v126 = vcombine.high %v124, %v124
    %v127 = vcombine.high %v107, %v107
    %v129 = vunpack.c.l.s4 1983009808
    %v130 = vunpack.c.0.s8 %v129
    %v131 = vlaneseq
    %v132 = vshrl.u32 %v131, 7
    %v133 = vsub.s32 %v130, %v132
    %v134 = vrot.slane %v107, %v133
    %v136 = vunpack.c.l.s4 1983009808
    %v137 = vunpack.c.0.s8 %v136
    %v138 = vlaneseq
    %v139 = vshrl.u32 %v138, 7
    %v140 = vsub.s32 %v137, %v139
    %v141 = vrot.slane %v127, %v140
    %v142 = vcombine.high %v134, %v134
    %v143 = vcombine.high %v141, %v141
    %v152 = vpack.c.bf16 %v117, %v117
    %v153 = vpack.c.bf16 %v125, %v125
    %v154 = vpack.c.bf16 %v124, %v124
    %v155 = vpack.c.bf16 %v126, %v126
    %v156 = vpack.c.bf16 %v134, %v134
    %v157 = vpack.c.bf16 %v142, %v142
    %v158 = vpack.c.bf16 %v141, %v141
    %v159 = vpack.c.bf16 %v143, %v143
    %v160 = vld [vmem:[#allocation5] sm:$0xf]
    %v161 = vld [vmem:[#allocation5 + $0x4] sm:$0xf]
    %v162 = vld [vmem:[#allocation5 + $0x8] sm:$0xf]
    %v163 = vld [vmem:[#allocation5 + $0xc] sm:$0xf]
    %v164 = vld [vmem:[#allocation5 + $0x10] sm:$0xf]
    %v165 = vld [vmem:[#allocation5 + $0x14] sm:$0xf]
    %v166 = vld [vmem:[#allocation5 + $0x18] sm:$0xf]
    %v167 = vld [vmem:[#allocation5 + $0x1c] sm:$0xf]
    %v168 = vld [vmem:[#allocation5 + $0x20] sm:$0xf]
    %v169 = vld [vmem:[#allocation5 + $0x24] sm:$0xf]
    %v170 = vld [vmem:[#allocation5 + $0x28] sm:$0xf]
    %v171 = vld [vmem:[#allocation5 + $0x2c] sm:$0xf]
    %v172 = vld [vmem:[#allocation5 + $0x30] sm:$0xf]
    %v173 = vld [vmem:[#allocation5 + $0x34] sm:$0xf]
    %v174 = vld [vmem:[#allocation5 + $0x38] sm:$0xf]
    %v175 = vld [vmem:[#allocation5 + $0x3c] sm:$0xf]
    %v176 = vld [vmem:[#allocation5 + $0x40] sm:$0xf]
    %v177 = vld [vmem:[#allocation5 + $0x44] sm:$0xf]
    %v178 = vld [vmem:[#allocation5 + $0x48] sm:$0xf]
    %v179 = vld [vmem:[#allocation5 + $0x4c] sm:$0xf]
    %v180 = vld [vmem:[#allocation5 + $0x50] sm:$0xf]
    %v181 = vld [vmem:[#allocation5 + $0x54] sm:$0xf]
    %v182 = vld [vmem:[#allocation5 + $0x58] sm:$0xf]
    %v183 = vld [vmem:[#allocation5 + $0x5c] sm:$0xf]
    %v184 = vld [vmem:[#allocation5 + $0x60] sm:$0xf]
    %v185 = vld [vmem:[#allocation5 + $0x64] sm:$0xf]
    %v186 = vld [vmem:[#allocation5 + $0x68] sm:$0xf]
    %v187 = vld [vmem:[#allocation5 + $0x6c] sm:$0xf]
    %v188 = vld [vmem:[#allocation5 + $0x70] sm:$0xf]
    %v189 = vld [vmem:[#allocation5 + $0x74] sm:$0xf]
    %v190 = vld [vmem:[#allocation5 + $0x78] sm:$0xf]
    %v191 = vld [vmem:[#allocation5 + $0x7c] sm:$0xf]
    %v192 = vld [vmem:[#allocation5 + $0x80] sm:$0xf]
    %v193 = vld [vmem:[#allocation5 + $0x84] sm:$0xf]
    %v194 = vld [vmem:[#allocation5 + $0x88] sm:$0xf]
    %v195 = vld [vmem:[#allocation5 + $0x8c] sm:$0xf]
    %v196 = vld [vmem:[#allocation5 + $0x90] sm:$0xf]
    %v197 = vld [vmem:[#allocation5 + $0x94] sm:$0xf]
    %v198 = vld [vmem:[#allocation5 + $0x98] sm:$0xf]
    %v199 = vld [vmem:[#allocation5 + $0x9c] sm:$0xf]
    %v200 = vld [vmem:[#allocation5 + $0xa0] sm:$0xf]
    %v201 = vld [vmem:[#allocation5 + $0xa4] sm:$0xf]
    %v202 = vld [vmem:[#allocation5 + $0xa8] sm:$0xf]
    %v203 = vld [vmem:[#allocation5 + $0xac] sm:$0xf]
    %v204 = vld [vmem:[#allocation5 + $0xb0] sm:$0xf]
    %v205 = vld [vmem:[#allocation5 + $0xb4] sm:$0xf]
    %v206 = vld [vmem:[#allocation5 + $0xb8] sm:$0xf]
    %v207 = vld [vmem:[#allocation5 + $0xbc] sm:$0xf]
    %v208 = vld [vmem:[#allocation5 + $0xc0] sm:$0xf]
    %v209 = vld [vmem:[#allocation5 + $0xc4] sm:$0xf]
    %v210 = vld [vmem:[#allocation5 + $0xc8] sm:$0xf]
    %v211 = vld [vmem:[#allocation5 + $0xcc] sm:$0xf]
    %v212 = vld [vmem:[#allocation5 + $0xd0] sm:$0xf]
    %v213 = vld [vmem:[#allocation5 + $0xd4] sm:$0xf]
    %v214 = vld [vmem:[#allocation5 + $0xd8] sm:$0xf]
    %v215 = vld [vmem:[#allocation5 + $0xdc] sm:$0xf]
    %v216 = vld [vmem:[#allocation5 + $0xe0] sm:$0xf]
    %v217 = vld [vmem:[#allocation5 + $0xe4] sm:$0xf]
    %v218 = vld [vmem:[#allocation5 + $0xe8] sm:$0xf]
    %v219 = vld [vmem:[#allocation5 + $0xec] sm:$0xf]
    %v220 = vld [vmem:[#allocation5 + $0xf0] sm:$0xf]
    %v221 = vld [vmem:[#allocation5 + $0xf4] sm:$0xf]
    %v222 = vld [vmem:[#allocation5 + $0xf8] sm:$0xf]
    %v223 = vld [vmem:[#allocation5 + $0xfc] sm:$0xf]
    %v224 = vld [vmem:[#allocation5 + $0x100] sm:$0xf]
    %v225 = vld [vmem:[#allocation5 + $0x104] sm:$0xf]
    %v226 = vld [vmem:[#allocation5 + $0x108] sm:$0xf]
    %v227 = vld [vmem:[#allocation5 + $0x10c] sm:$0xf]
    %v228 = vld [vmem:[#allocation5 + $0x110] sm:$0xf]
    %v229 = vld [vmem:[#allocation5 + $0x114] sm:$0xf]
    %v230 = vld [vmem:[#allocation5 + $0x118] sm:$0xf]
    %v231 = vld [vmem:[#allocation5 + $0x11c] sm:$0xf]
    %v232 = vld [vmem:[#allocation5 + $0x120] sm:$0xf]
    %v233 = vld [vmem:[#allocation5 + $0x124] sm:$0xf]
    %v234 = vld [vmem:[#allocation5 + $0x128] sm:$0xf]
    %v235 = vld [vmem:[#allocation5 + $0x12c] sm:$0xf]
    %v236 = vld [vmem:[#allocation5 + $0x130] sm:$0xf]
    %v237 = vld [vmem:[#allocation5 + $0x134] sm:$0xf]
    %v238 = vld [vmem:[#allocation5 + $0x138] sm:$0xf]
    %v239 = vld [vmem:[#allocation5 + $0x13c] sm:$0xf]
    %v240 = vld [vmem:[#allocation5 + $0x140] sm:$0xf]
    %v241 = vld [vmem:[#allocation5 + $0x144] sm:$0xf]
    %v242 = vld [vmem:[#allocation5 + $0x148] sm:$0xf]
    %v243 = vld [vmem:[#allocation5 + $0x14c] sm:$0xf]
    %v244 = vld [vmem:[#allocation5 + $0x150] sm:$0xf]
    %v245 = vld [vmem:[#allocation5 + $0x154] sm:$0xf]
    %v246 = vld [vmem:[#allocation5 + $0x158] sm:$0xf]
    %v247 = vld [vmem:[#allocation5 + $0x15c] sm:$0xf]
    %v248 = vld [vmem:[#allocation5 + $0x160] sm:$0xf]
    %v249 = vld [vmem:[#allocation5 + $0x164] sm:$0xf]
    %v250 = vld [vmem:[#allocation5 + $0x168] sm:$0xf]
    %v251 = vld [vmem:[#allocation5 + $0x16c] sm:$0xf]
    %v252 = vld [vmem:[#allocation5 + $0x170] sm:$0xf]
    %v253 = vld [vmem:[#allocation5 + $0x174] sm:$0xf]
    %v254 = vld [vmem:[#allocation5 + $0x178] sm:$0xf]
    %v255 = vld [vmem:[#allocation5 + $0x17c] sm:$0xf]
    %v256 = vld [vmem:[#allocation5 + $0x180] sm:$0xf]
    %v257 = vld [vmem:[#allocation5 + $0x184] sm:$0xf]
    %v258 = vld [vmem:[#allocation5 + $0x188] sm:$0xf]
    %v259 = vld [vmem:[#allocation5 + $0x18c] sm:$0xf]
    %v260 = vld [vmem:[#allocation5 + $0x190] sm:$0xf]
    %v261 = vld [vmem:[#allocation5 + $0x194] sm:$0xf]
    %v262 = vld [vmem:[#allocation5 + $0x198] sm:$0xf]
    %v263 = vld [vmem:[#allocation5 + $0x19c] sm:$0xf]
    %v264 = vld [vmem:[#allocation5 + $0x1a0] sm:$0xf]
    %v265 = vld [vmem:[#allocation5 + $0x1a4] sm:$0xf]
    %v266 = vld [vmem:[#allocation5 + $0x1a8] sm:$0xf]
    %v267 = vld [vmem:[#allocation5 + $0x1ac] sm:$0xf]
    %v268 = vld [vmem:[#allocation5 + $0x1b0] sm:$0xf]
    %v269 = vld [vmem:[#allocation5 + $0x1b4] sm:$0xf]
    %v270 = vld [vmem:[#allocation5 + $0x1b8] sm:$0xf]
    %v271 = vld [vmem:[#allocation5 + $0x1bc] sm:$0xf]
    %v272 = vld [vmem:[#allocation5 + $0x1c0] sm:$0xf]
    %v273 = vld [vmem:[#allocation5 + $0x1c4] sm:$0xf]
    %v274 = vld [vmem:[#allocation5 + $0x1c8] sm:$0xf]
    %v275 = vld [vmem:[#allocation5 + $0x1cc] sm:$0xf]
    %v276 = vld [vmem:[#allocation5 + $0x1d0] sm:$0xf]
    %v277 = vld [vmem:[#allocation5 + $0x1d4] sm:$0xf]
    %v278 = vld [vmem:[#allocation5 + $0x1d8] sm:$0xf]
    %v279 = vld [vmem:[#allocation5 + $0x1dc] sm:$0xf]
    %v280 = vld [vmem:[#allocation5 + $0x1e0] sm:$0xf]
    %v281 = vld [vmem:[#allocation5 + $0x1e4] sm:$0xf]
    %v282 = vld [vmem:[#allocation5 + $0x1e8] sm:$0xf]
    %v283 = vld [vmem:[#allocation5 + $0x1ec] sm:$0xf]
    %v284 = vld [vmem:[#allocation5 + $0x1f0] sm:$0xf]
    %v285 = vld [vmem:[#allocation5 + $0x1f4] sm:$0xf]
    %v286 = vld [vmem:[#allocation5 + $0x1f8] sm:$0xf]
    %v287 = vld [vmem:[#allocation5 + $0x1fc] sm:$0xf]
    %v288 = vld [vmem:[%s3] sm:$0x1]
    %v290 = vlaneseq
    %v291 = vshrl.u32 %v290, 7
    %v292 = vsub.s32 0, %v291
    %v293 = vrot.slane %v288, %v292
    %v423 = vunpack.c.l.b16 %v160
    %v424 = vunpack.c.l.b16 %v161
    %v425 = vunpack.c.l.b16 %v162
    %v426 = vunpack.c.l.b16 %v163
    %v427 = vunpack.c.l.b16 %v164
    %v428 = vunpack.c.l.b16 %v165
    %v429 = vunpack.c.l.b16 %v166
    %v430 = vunpack.c.l.b16 %v167
    %v431 = vunpack.c.l.b16 %v168
    %v432 = vunpack.c.l.b16 %v169
    %v433 = vunpack.c.l.b16 %v170
    %v434 = vunpack.c.l.b16 %v171
    %v435 = vunpack.c.l.b16 %v172
    %v436 = vunpack.c.l.b16 %v173
    %v437 = vunpack.c.l.b16 %v174
    %v438 = vunpack.c.l.b16 %v175
    %v439 = vunpack.c.l.b16 %v176
    %v440 = vunpack.c.l.b16 %v177
    %v441 = vunpack.c.l.b16 %v178
    %v442 = vunpack.c.l.b16 %v179
    %v443 = vunpack.c.l.b16 %v180
    %v444 = vunpack.c.l.b16 %v181
    %v445 = vunpack.c.l.b16 %v182
    %v446 = vunpack.c.l.b16 %v183
    %v447 = vunpack.c.l.b16 %v184
    %v448 = vunpack.c.l.b16 %v185
    %v449 = vunpack.c.l.b16 %v186
    %v450 = vunpack.c.l.b16 %v187
    %v451 = vunpack.c.l.b16 %v188
    %v452 = vunpack.c.l.b16 %v189
    %v453 = vunpack.c.l.b16 %v190
    %v454 = vunpack.c.l.b16 %v191
    %v455 = vunpack.c.l.b16 %v192
    %v456 = vunpack.c.l.b16 %v193
    %v457 = vunpack.c.l.b16 %v194
    %v458 = vunpack.c.l.b16 %v195
    %v459 = vunpack.c.l.b16 %v196
    %v460 = vunpack.c.l.b16 %v197
    %v461 = vunpack.c.l.b16 %v198
    %v462 = vunpack.c.l.b16 %v199
    %v463 = vunpack.c.l.b16 %v200
    %v464 = vunpack.c.l.b16 %v201
    %v465 = vunpack.c.l.b16 %v202
    %v466 = vunpack.c.l.b16 %v203
    %v467 = vunpack.c.l.b16 %v204
    %v468 = vunpack.c.l.b16 %v205
    %v469 = vunpack.c.l.b16 %v206
    %v470 = vunpack.c.l.b16 %v207
    %v471 = vunpack.c.l.b16 %v208
    %v472 = vunpack.c.l.b16 %v209
    %v473 = vunpack.c.l.b16 %v210
    %v474 = vunpack.c.l.b16 %v211
    %v475 = vunpack.c.l.b16 %v212
    %v476 = vunpack.c.l.b16 %v213
    %v477 = vunpack.c.l.b16 %v214
    %v478 = vunpack.c.l.b16 %v215
    %v479 = vunpack.c.l.b16 %v216
    %v480 = vunpack.c.l.b16 %v217
    %v481 = vunpack.c.l.b16 %v218
    %v482 = vunpack.c.l.b16 %v219
    %v483 = vunpack.c.l.b16 %v220
    %v484 = vunpack.c.l.b16 %v221
    %v485 = vunpack.c.l.b16 %v222
    %v486 = vunpack.c.l.b16 %v223
    %v487 = vunpack.c.l.b16 %v224
    %v488 = vunpack.c.l.b16 %v225
    %v489 = vunpack.c.l.b16 %v226
    %v490 = vunpack.c.l.b16 %v227
    %v491 = vunpack.c.l.b16 %v228
    %v492 = vunpack.c.l.b16 %v229
    %v493 = vunpack.c.l.b16 %v230
    %v494 = vunpack.c.l.b16 %v231
    %v495 = vunpack.c.l.b16 %v232
    %v496 = vunpack.c.l.b16 %v233
    %v497 = vunpack.c.l.b16 %v234
    %v498 = vunpack.c.l.b16 %v235
    %v499 = vunpack.c.l.b16 %v236
    %v500 = vunpack.c.l.b16 %v237
    %v501 = vunpack.c.l.b16 %v238
    %v502 = vunpack.c.l.b16 %v239
    %v503 = vunpack.c.l.b16 %v240
    %v504 = vunpack.c.l.b16 %v241
    %v505 = vunpack.c.l.b16 %v242
    %v506 = vunpack.c.l.b16 %v243
    %v507 = vunpack.c.l.b16 %v244
    %v508 = vunpack.c.l.b16 %v245
    %v509 = vunpack.c.l.b16 %v246
    %v510 = vunpack.c.l.b16 %v247
    %v511 = vunpack.c.l.b16 %v248
    %v512 = vunpack.c.l.b16 %v249
    %v513 = vunpack.c.l.b16 %v250
    %v514 = vunpack.c.l.b16 %v251
    %v515 = vunpack.c.l.b16 %v252
    %v516 = vunpack.c.l.b16 %v253
    %v517 = vunpack.c.l.b16 %v254
    %v518 = vunpack.c.l.b16 %v255
    %v519 = vunpack.c.l.b16 %v256
    %v520 = vunpack.c.l.b16 %v257
    %v521 = vunpack.c.l.b16 %v258
    %v522 = vunpack.c.l.b16 %v259
    %v523 = vunpack.c.l.b16 %v260
    %v524 = vunpack.c.l.b16 %v261
    %v525 = vunpack.c.l.b16 %v262
    %v526 = vunpack.c.l.b16 %v263
    %v527 = vunpack.c.l.b16 %v264
    %v528 = vunpack.c.l.b16 %v265
    %v529 = vunpack.c.l.b16 %v266
    %v530 = vunpack.c.l.b16 %v267
    %v531 = vunpack.c.l.b16 %v268
    %v532 = vunpack.c.l.b16 %v269
    %v533 = vunpack.c.l.b16 %v270
    %v534 = vunpack.c.l.b16 %v271
    %v535 = vunpack.c.l.b16 %v272
    %v536 = vunpack.c.l.b16 %v273
    %v537 = vunpack.c.l.b16 %v274
    %v538 = vunpack.c.l.b16 %v275
    %v539 = vunpack.c.l.b16 %v276
    %v540 = vunpack.c.l.b16 %v277
    %v541 = vunpack.c.l.b16 %v278
    %v542 = vunpack.c.l.b16 %v279
    %v543 = vunpack.c.l.b16 %v280
    %v544 = vunpack.c.l.b16 %v281
    %v545 = vunpack.c.l.b16 %v282
    %v546 = vunpack.c.l.b16 %v283
    %v547 = vunpack.c.l.b16 %v284
    %v548 = vunpack.c.l.b16 %v285
    %v549 = vunpack.c.l.b16 %v286
    %v550 = vunpack.c.l.b16 %v287
    %v551 = vpack.c.b16 %v424, %v423
    %v552 = vpack.c.b16 %v426, %v425
    %v553 = vpack.c.b16 %v428, %v427
    %v554 = vpack.c.b16 %v430, %v429
    %v555 = vpack.c.b16 %v432, %v431
    %v556 = vpack.c.b16 %v434, %v433
    %v557 = vpack.c.b16 %v436, %v435
    %v558 = vpack.c.b16 %v438, %v437
    %v559 = vpack.c.b16 %v440, %v439
    %v560 = vpack.c.b16 %v442, %v441
    %v561 = vpack.c.b16 %v444, %v443
    %v562 = vpack.c.b16 %v446, %v445
    %v563 = vpack.c.b16 %v448, %v447
    %v564 = vpack.c.b16 %v450, %v449
    %v565 = vpack.c.b16 %v452, %v451
    %v566 = vpack.c.b16 %v454, %v453
    %v567 = vpack.c.b16 %v456, %v455
    %v568 = vpack.c.b16 %v458, %v457
    %v569 = vpack.c.b16 %v460, %v459
    %v570 = vpack.c.b16 %v462, %v461
    %v571 = vpack.c.b16 %v464, %v463
    %v572 = vpack.c.b16 %v466, %v465
    %v573 = vpack.c.b16 %v468, %v467
    %v574 = vpack.c.b16 %v470, %v469
    %v575 = vpack.c.b16 %v472, %v471
    %v576 = vpack.c.b16 %v474, %v473
    %v577 = vpack.c.b16 %v476, %v475
    %v578 = vpack.c.b16 %v478, %v477
    %v579 = vpack.c.b16 %v480, %v479
    %v580 = vpack.c.b16 %v482, %v481
    %v581 = vpack.c.b16 %v484, %v483
    %v582 = vpack.c.b16 %v486, %v485
    %v583 = vpack.c.b16 %v488, %v487
    %v584 = vpack.c.b16 %v490, %v489
    %v585 = vpack.c.b16 %v492, %v491
    %v586 = vpack.c.b16 %v494, %v493
    %v587 = vpack.c.b16 %v496, %v495
    %v588 = vpack.c.b16 %v498, %v497
    %v589 = vpack.c.b16 %v500, %v499
    %v590 = vpack.c.b16 %v502, %v501
    %v591 = vpack.c.b16 %v504, %v503
    %v592 = vpack.c.b16 %v506, %v505
    %v593 = vpack.c.b16 %v508, %v507
    %v594 = vpack.c.b16 %v510, %v509
    %v595 = vpack.c.b16 %v512, %v511
    %v596 = vpack.c.b16 %v514, %v513
    %v597 = vpack.c.b16 %v516, %v515
    %v598 = vpack.c.b16 %v518, %v517
    %v599 = vpack.c.b16 %v520, %v519
    %v600 = vpack.c.b16 %v522, %v521
    %v601 = vpack.c.b16 %v524, %v523
    %v602 = vpack.c.b16 %v526, %v525
    %v603 = vpack.c.b16 %v528, %v527
    %v604 = vpack.c.b16 %v530, %v529
    %v605 = vpack.c.b16 %v532, %v531
    %v606 = vpack.c.b16 %v534, %v533
    %v607 = vpack.c.b16 %v536, %v535
    %v608 = vpack.c.b16 %v538, %v537
    %v609 = vpack.c.b16 %v540, %v539
    %v610 = vpack.c.b16 %v542, %v541
    %v611 = vpack.c.b16 %v544, %v543
    %v612 = vpack.c.b16 %v546, %v545
    %v613 = vpack.c.b16 %v548, %v547
    %v614 = vpack.c.b16 %v550, %v549
    %679 = vmatprep.subr.bf16.mxu0 0
    %680 = vmatpush1.bf16.msra.mxu0 %v551
    %681 = vmatprep.subr.bf16.mxu0 0
    %682 = vmatpush1.bf16.msra.mxu0 %v552
    %683 = vmatprep.subr.bf16.mxu0 0
    %684 = vmatpush1.bf16.msra.mxu0 %v553
    %685 = vmatprep.subr.bf16.mxu0 0
    %686 = vmatpush1.bf16.msra.mxu0 %v554
    %687 = vmatprep.subr.bf16.mxu0 0
    %688 = vmatpush1.bf16.msra.mxu0 %v555
    %689 = vmatprep.subr.bf16.mxu0 0
    %690 = vmatpush1.bf16.msra.mxu0 %v556
    %691 = vmatprep.subr.bf16.mxu0 0
    %692 = vmatpush1.bf16.msra.mxu0 %v557
    %693 = vmatprep.subr.bf16.mxu0 0
    %694 = vmatpush1.bf16.msra.mxu0 %v558
    %695 = vmatprep.subr.bf16.mxu0 0
    %696 = vmatpush1.bf16.msra.mxu0 %v559
    %697 = vmatprep.subr.bf16.mxu0 0
    %698 = vmatpush1.bf16.msra.mxu0 %v560
    %699 = vmatprep.subr.bf16.mxu0 0
    %700 = vmatpush1.bf16.msra.mxu0 %v561
    %701 = vmatprep.subr.bf16.mxu0 0
    %702 = vmatpush1.bf16.msra.mxu0 %v562
    %703 = vmatprep.subr.bf16.mxu0 0
    %704 = vmatpush1.bf16.msra.mxu0 %v563
    %705 = vmatprep.subr.bf16.mxu0 0
    %706 = vmatpush1.bf16.msra.mxu0 %v564
    %707 = vmatprep.subr.bf16.mxu0 0
    %708 = vmatpush1.bf16.msra.mxu0 %v565
    %709 = vmatprep.subr.bf16.mxu0 0
    %710 = vmatpush1.bf16.msra.mxu0 %v566
    %711 = vmatprep.mubr.bf16.mxu0 %v153
    %712 = vmatmul.mubr.bf16.gmra.mrb[0].mxu0 %v152
    %v713 = vpop.f32.mrb[0].mxu0
    %v714 = vadd.f32 %v293, %v713
    %v715 = vpop.f32.mrb[0].mxu0
    %v716 = vpop.f32.mrb[0].mxu0
    %v717 = vpop.f32.mrb[0].mxu0
    %718 = vdwg.mxu0
    %719 = vmatprep.subr.bf16.mxu0 0
    %720 = vmatpush1.bf16.msra.mxu0 %v567
    %721 = vmatprep.subr.bf16.mxu0 0
    %722 = vmatpush1.bf16.msra.mxu0 %v568
    %723 = vmatprep.subr.bf16.mxu0 0
    %724 = vmatpush1.bf16.msra.mxu0 %v569
    %725 = vmatprep.subr.bf16.mxu0 0
    %726 = vmatpush1.bf16.msra.mxu0 %v570
    %727 = vmatprep.subr.bf16.mxu0 0
    %728 = vmatpush1.bf16.msra.mxu0 %v571
    %729 = vmatprep.subr.bf16.mxu0 0
    %730 = vmatpush1.bf16.msra.mxu0 %v572
    %731 = vmatprep.subr.bf16.mxu0 0
    %732 = vmatpush1.bf16.msra.mxu0 %v573
    %733 = vmatprep.subr.bf16.mxu0 0
    %734 = vmatpush1.bf16.msra.mxu0 %v574
    %735 = vmatprep.subr.bf16.mxu0 0
    %736 = vmatpush1.bf16.msra.mxu0 %v575
    %737 = vmatprep.subr.bf16.mxu0 0
    %738 = vmatpush1.bf16.msra.mxu0 %v576
    %739 = vmatprep.subr.bf16.mxu0 0
    %740 = vmatpush1.bf16.msra.mxu0 %v577
    %741 = vmatprep.subr.bf16.mxu0 0
    %742 = vmatpush1.bf16.msra.mxu0 %v578
    %743 = vmatprep.subr.bf16.mxu0 0
    %744 = vmatpush1.bf16.msra.mxu0 %v579
    %745 = vmatprep.subr.bf16.mxu0 0
    %746 = vmatpush1.bf16.msra.mxu0 %v580
    %747 = vmatprep.subr.bf16.mxu0 0
    %748 = vmatpush1.bf16.msra.mxu0 %v581
    %749 = vmatprep.subr.bf16.mxu0 0
    %750 = vmatpush1.bf16.msra.mxu0 %v582
    %751 = vmatprep.mubr.bf16.mxu0 %v155
    %752 = vmatmul.mubr.bf16.gmra.mrb[0].mxu0 %v154
    %v753 = vpop.f32.mrb[0].mxu0
    %v754 = vadd.f32 %v714, %v753
    %v755 = vpop.f32.mrb[0].mxu0
    %v756 = vpop.f32.mrb[0].mxu0
    %v757 = vpop.f32.mrb[0].mxu0
    %758 = vdwg.mxu0
    %759 = vmatprep.subr.bf16.mxu0 0
    %760 = vmatpush1.bf16.msra.mxu0 %v583
    %761 = vmatprep.subr.bf16.mxu0 0
    %762 = vmatpush1.bf16.msra.mxu0 %v584
    %763 = vmatprep.subr.bf16.mxu0 0
    %764 = vmatpush1.bf16.msra.mxu0 %v585
    %765 = vmatprep.subr.bf16.mxu0 0
    %766 = vmatpush1.bf16.msra.mxu0 %v586
    %767 = vmatprep.subr.bf16.mxu0 0
    %768 = vmatpush1.bf16.msra.mxu0 %v587
    %769 = vmatprep.subr.bf16.mxu0 0
    %770 = vmatpush1.bf16.msra.mxu0 %v588
    %771 = vmatprep.subr.bf16.mxu0 0
    %772 = vmatpush1.bf16.msra.mxu0 %v589
    %773 = vmatprep.subr.bf16.mxu0 0
    %774 = vmatpush1.bf16.msra.mxu0 %v590
    %775 = vmatprep.subr.bf16.mxu0 0
    %776 = vmatpush1.bf16.msra.mxu0 %v591
    %777 = vmatprep.subr.bf16.mxu0 0
    %778 = vmatpush1.bf16.msra.mxu0 %v592
    %779 = vmatprep.subr.bf16.mxu0 0
    %780 = vmatpush1.bf16.msra.mxu0 %v593
    %781 = vmatprep.subr.bf16.mxu0 0
    %782 = vmatpush1.bf16.msra.mxu0 %v594
    %783 = vmatprep.subr.bf16.mxu0 0
    %784 = vmatpush1.bf16.msra.mxu0 %v595
    %785 = vmatprep.subr.bf16.mxu0 0
    %786 = vmatpush1.bf16.msra.mxu0 %v596
    %787 = vmatprep.subr.bf16.mxu0 0
    %788 = vmatpush1.bf16.msra.mxu0 %v597
    %789 = vmatprep.subr.bf16.mxu0 0
    %790 = vmatpush1.bf16.msra.mxu0 %v598
    %791 = vmatprep.mubr.bf16.mxu0 %v157
    %792 = vmatmul.mubr.bf16.gmra.mrb[0].mxu0 %v156
    %v793 = vpop.f32.mrb[0].mxu0
    %v794 = vadd.f32 %v754, %v793
    %v795 = vpop.f32.mrb[0].mxu0
    %v796 = vpop.f32.mrb[0].mxu0
    %v797 = vpop.f32.mrb[0].mxu0
    %798 = vdwg.mxu0
    %799 = vmatprep.subr.bf16.mxu0 0
    %800 = vmatpush1.bf16.msra.mxu0 %v599
    %801 = vmatprep.subr.bf16.mxu0 0
    %802 = vmatpush1.bf16.msra.mxu0 %v600
    %803 = vmatprep.subr.bf16.mxu0 0
    %804 = vmatpush1.bf16.msra.mxu0 %v601
    %805 = vmatprep.subr.bf16.mxu0 0
    %806 = vmatpush1.bf16.msra.mxu0 %v602
    %807 = vmatprep.subr.bf16.mxu0 0
    %808 = vmatpush1.bf16.msra.mxu0 %v603
    %809 = vmatprep.subr.bf16.mxu0 0
    %810 = vmatpush1.bf16.msra.mxu0 %v604
    %811 = vmatprep.subr.bf16.mxu0 0
    %812 = vmatpush1.bf16.msra.mxu0 %v605
    %813 = vmatprep.subr.bf16.mxu0 0
    %814 = vmatpush1.bf16.msra.mxu0 %v606
    %815 = vmatprep.subr.bf16.mxu0 0
    %816 = vmatpush1.bf16.msra.mxu0 %v607
    %817 = vmatprep.subr.bf16.mxu0 0
    %818 = vmatpush1.bf16.msra.mxu0 %v608
    %819 = vmatprep.subr.bf16.mxu0 0
    %820 = vmatpush1.bf16.msra.mxu0 %v609
    %821 = vmatprep.subr.bf16.mxu0 0
    %822 = vmatpush1.bf16.msra.mxu0 %v610
    %823 = vmatprep.subr.bf16.mxu0 0
    %824 = vmatpush1.bf16.msra.mxu0 %v611
    %825 = vmatprep.subr.bf16.mxu0 0
    %826 = vmatpush1.bf16.msra.mxu0 %v612
    %827 = vmatprep.subr.bf16.mxu0 0
    %828 = vmatpush1.bf16.msra.mxu0 %v613
    %829 = vmatprep.subr.bf16.mxu0 0
    %830 = vmatpush1.bf16.msra.mxu0 %v614
    %831 = vmatprep.mubr.bf16.mxu0 %v159
    %832 = vmatmul.mubr.bf16.gmra.mrb[0].mxu0 %v158
    %v833 = vpop.f32.mrb[0].mxu0
    %v834 = vadd.f32 %v794, %v833
    %v835 = vpop.f32.mrb[0].mxu0
    %v836 = vpop.f32.mrb[0].mxu0
    %v837 = vpop.f32.mrb[0].mxu0
    %838 = vdwg.mxu0
    %v839 = vmax.f32 %v834, 0.0
    %v840 = vpack.c.bf16 %v839, %v839
    %v841 = vld [vmem:[#allocation7] sm:$0xf]
    %v842 = vld [vmem:[#allocation7 + $0x4] sm:$0xf]
    %v843 = vld [vmem:[#allocation7 + $0x8] sm:$0xf]
    %v844 = vld [vmem:[#allocation7 + $0xc] sm:$0xf]
    %v845 = vld [vmem:[#allocation7 + $0x10] sm:$0xf]
    %v846 = vld [vmem:[#allocation7 + $0x14] sm:$0xf]
    %v847 = vld [vmem:[#allocation7 + $0x18] sm:$0xf]
    %v848 = vld [vmem:[#allocation7 + $0x1c] sm:$0xf]
    %v849 = vld [vmem:[#allocation7 + $0x20] sm:$0xf]
    %v850 = vld [vmem:[#allocation7 + $0x24] sm:$0xf]
    %v851 = vld [vmem:[#allocation7 + $0x28] sm:$0xf]
    %v852 = vld [vmem:[#allocation7 + $0x2c] sm:$0xf]
    %v853 = vld [vmem:[#allocation7 + $0x30] sm:$0xf]
    %v854 = vld [vmem:[#allocation7 + $0x34] sm:$0xf]
    %v855 = vld [vmem:[#allocation7 + $0x38] sm:$0xf]
    %v856 = vld [vmem:[#allocation7 + $0x3c] sm:$0xf]
    %v857 = vld [vmem:[%s5] sm:$0x1]
    %v859 = vlaneseq
    %v860 = vshrl.u32 %v859, 7
    %v861 = vsub.s32 0, %v860
    %v862 = vrot.slane %v857, %v861
    %v880 = vunpack.c.l.b16 %v841
    %v881 = vunpack.c.l.b16 %v842
    %v882 = vunpack.c.l.b16 %v843
    %v883 = vunpack.c.l.b16 %v844
    %v884 = vunpack.c.l.b16 %v845
    %v885 = vunpack.c.l.b16 %v846
    %v886 = vunpack.c.l.b16 %v847
    %v887 = vunpack.c.l.b16 %v848
    %v888 = vunpack.c.l.b16 %v849
    %v889 = vunpack.c.l.b16 %v850
    %v890 = vunpack.c.l.b16 %v851
    %v891 = vunpack.c.l.b16 %v852
    %v892 = vunpack.c.l.b16 %v853
    %v893 = vunpack.c.l.b16 %v854
    %v894 = vunpack.c.l.b16 %v855
    %v895 = vunpack.c.l.b16 %v856
    %v896 = vpack.c.b16 %v881, %v880
    %v897 = vpack.c.b16 %v883, %v882
    %v898 = vpack.c.b16 %v885, %v884
    %v899 = vpack.c.b16 %v887, %v886
    %v900 = vpack.c.b16 %v889, %v888
    %v901 = vpack.c.b16 %v891, %v890
    %v902 = vpack.c.b16 %v893, %v892
    %v903 = vpack.c.b16 %v895, %v894
    %912 = vmatprep.subr.bf16.mxu0 0
    %913 = vmatpush1.bf16.msra.mxu0 %v896
    %914 = vmatprep.subr.bf16.mxu0 0
    %915 = vmatpush1.bf16.msra.mxu0 %v897
    %916 = vmatprep.subr.bf16.mxu0 0
    %917 = vmatpush1.bf16.msra.mxu0 %v898
    %918 = vmatprep.subr.bf16.mxu0 0
    %919 = vmatpush1.bf16.msra.mxu0 %v899
    %920 = vmatprep.subr.bf16.mxu0 0
    %921 = vmatpush1.bf16.msra.mxu0 %v900
    %922 = vmatprep.subr.bf16.mxu0 0
    %923 = vmatpush1.bf16.msra.mxu0 %v901
    %924 = vmatprep.subr.bf16.mxu0 0
    %925 = vmatpush1.bf16.msra.mxu0 %v902
    %926 = vmatprep.subr.bf16.mxu0 0
    %927 = vmatpush1.bf16.msra.mxu0 %v903
    %928 = vmatprep.subr.bf16.mxu0 0
    %929 = vmatpush1.bf16.msra.mxu0 0
    %930 = vmatprep.subr.bf16.mxu0 0
    %931 = vmatpush1.bf16.msra.mxu0 0
    %932 = vmatprep.subr.bf16.mxu0 0
    %933 = vmatpush1.bf16.msra.mxu0 0
    %934 = vmatprep.subr.bf16.mxu0 0
    %935 = vmatpush1.bf16.msra.mxu0 0
    %936 = vmatprep.subr.bf16.mxu0 0
    %937 = vmatpush1.bf16.msra.mxu0 0
    %938 = vmatprep.subr.bf16.mxu0 0
    %939 = vmatpush1.bf16.msra.mxu0 0
    %940 = vmatprep.subr.bf16.mxu0 0
    %941 = vmatpush1.bf16.msra.mxu0 0
    %942 = vmatprep.subr.bf16.mxu0 0
    %943 = vmatpush1.bf16.msra.mxu0 0
    %944 = vmatprep.mubr.bf16.mxu0 0
    %945 = vmatmul.mubr.bf16.gmra.mrb[0].mxu0 %v840
    %v946 = vpop.f32.mrb[0].mxu0
    %v947 = vadd.f32 %v862, %v946
    %v948 = vpop.f32.mrb[0].mxu0
    %v949 = vpop.f32.mrb[0].mxu0
    %v950 = vpop.f32.mrb[0].mxu0
    %951 = vdwg.mxu0
    %952 = vst [vmem:[#allocation12] sm:$0x3] %v947
    %v953 = vld [vmem:[%s1] sm:$0x3]
    %v954 = vadd.f32 %v947, %v953
    %vm955 = vcmask 1041408
    %v956 = vsel %vm955, %v954, -inf
    %957 = vmax.xlane.f32.xlu0 %v956
    %v958 = vpop.xlane.xlu0 %957
    %v959 = vsub.f32 %v954, %v958
    %v960 = vmul.f32 %v959, 1.442695
    %v961 = vpow.pop %v960
    %v962 = vsel %vm955, %v961, 0.0
    %963 = vadd.xlane.f32.xlu0 %v962
    %v964 = vpop.xlane.xlu0 %963
    %v965 = vrcp.pop %v964
    %v966 = vmul.f32 %v961, %v965
    %v967 = vpack.c.bf16 %v966, %v966
    %v968 = vld [vmem:[#allocation8] sm:$0xf]
    %v969 = vld [vmem:[#allocation8 + $0x4] sm:$0xf]
    %v970 = vld [vmem:[#allocation8 + $0x8] sm:$0xf]
    %v971 = vld [vmem:[#allocation8 + $0xc] sm:$0xf]
    %v972 = vld [vmem:[#allocation8 + $0x10] sm:$0xf]
    %v973 = vld [vmem:[#allocation8 + $0x14] sm:$0xf]
    %v974 = vld [vmem:[#allocation8 + $0x18] sm:$0xf]
    %v975 = vld [vmem:[#allocation8 + $0x1c] sm:$0xf]
    %v976 = vld [vmem:[#allocation8 + $0x20] sm:$0xf]
    %v977 = vld [vmem:[#allocation8 + $0x24] sm:$0xf]
    %v978 = vld [vmem:[#allocation8 + $0x28] sm:$0xf]
    %v979 = vld [vmem:[#allocation8 + $0x2c] sm:$0xf]
    %v980 = vld [vmem:[#allocation8 + $0x30] sm:$0xf]
    %v981 = vld [vmem:[#allocation8 + $0x34] sm:$0xf]
    %v982 = vld [vmem:[#allocation8 + $0x38] sm:$0xf]
    %v983 = vld [vmem:[#allocation8 + $0x3c] sm:$0xf]
    %v984 = vld [vmem:[%s7] sm:$0x1]
    %v986 = vlaneseq
    %v987 = vshrl.u32 %v986, 7
    %v988 = vsub.s32 0, %v987
    %v989 = vrot.slane %v984, %v988
    %v1007 = vunpack.c.l.b16 %v968
    %v1008 = vunpack.c.l.b16 %v969
    %v1009 = vunpack.c.l.b16 %v970
    %v1010 = vunpack.c.l.b16 %v971
    %v1011 = vunpack.c.l.b16 %v972
    %v1012 = vunpack.c.l.b16 %v973
    %v1013 = vunpack.c.l.b16 %v974
    %v1014 = vunpack.c.l.b16 %v975
    %v1015 = vunpack.c.l.b16 %v976
    %v1016 = vunpack.c.l.b16 %v977
    %v1017 = vunpack.c.l.b16 %v978
    %v1018 = vunpack.c.l.b16 %v979
    %v1019 = vunpack.c.l.b16 %v980
    %v1020 = vunpack.c.l.b16 %v981
    %v1021 = vunpack.c.l.b16 %v982
    %v1022 = vunpack.c.l.b16 %v983
    %v1023 = vpack.c.b16 %v1008, %v1007
    %v1024 = vpack.c.b16 %v1010, %v1009
    %v1025 = vpack.c.b16 %v1012, %v1011
    %v1026 = vpack.c.b16 %v1014, %v1013
    %v1027 = vpack.c.b16 %v1016, %v1015
    %v1028 = vpack.c.b16 %v1018, %v1017
    %v1029 = vpack.c.b16 %v1020, %v1019
    %v1030 = vpack.c.b16 %v1022, %v1021
    %1039 = vmatprep.subr.bf16.mxu0 0
    %1040 = vmatpush1.bf16.msra.mxu0 %v1023
    %1041 = vmatprep.subr.bf16.mxu0 0
    %1042 = vmatpush1.bf16.msra.mxu0 %v1024
    %1043 = vmatprep.subr.bf16.mxu0 0
    %1044 = vmatpush1.bf16.msra.mxu0 %v1025
    %1045 = vmatprep.subr.bf16.mxu0 0
    %1046 = vmatpush1.bf16.msra.mxu0 %v1026
    %1047 = vmatprep.subr.bf16.mxu0 0
    %1048 = vmatpush1.bf16.msra.mxu0 %v1027
    %1049 = vmatprep.subr.bf16.mxu0 0
    %1050 = vmatpush1.bf16.msra.mxu0 %v1028
    %1051 = vmatprep.subr.bf16.mxu0 0
    %1052 = vmatpush1.bf16.msra.mxu0 %v1029
    %1053 = vmatprep.subr.bf16.mxu0 0
    %1054 = vmatpush1.bf16.msra.mxu0 %v1030
    %1055 = vmatprep.subr.bf16.mxu0 0
    %1056 = vmatpush1.bf16.msra.mxu0 0
    %1057 = vmatprep.subr.bf16.mxu0 0
    %1058 = vmatpush1.bf16.msra.mxu0 0
    %1059 = vmatprep.subr.bf16.mxu0 0
    %1060 = vmatpush1.bf16.msra.mxu0 0
    %1061 = vmatprep.subr.bf16.mxu0 0
    %1062 = vmatpush1.bf16.msra.mxu0 0
    %1063 = vmatprep.subr.bf16.mxu0 0
    %1064 = vmatpush1.bf16.msra.mxu0 0
    %1065 = vmatprep.subr.bf16.mxu0 0
    %1066 = vmatpush1.bf16.msra.mxu0 0
    %1067 = vmatprep.subr.bf16.mxu0 0
    %1068 = vmatpush1.bf16.msra.mxu0 0
    %1069 = vmatprep.subr.bf16.mxu0 0
    %1070 = vmatpush1.bf16.msra.mxu0 0
    %1071 = vmatprep.mubr.bf16.mxu0 0
    %1072 = vmatmul.mubr.bf16.gmra.mrb[0].mxu0 %v967
    %v1073 = vpop.f32.mrb[0].mxu0
    %v1074 = vadd.f32 %v989, %v1073
    %v1075 = vpop.f32.mrb[0].mxu0
    %v1076 = vpop.f32.mrb[0].mxu0
    %v1077 = vpop.f32.mrb[0].mxu0
    %1078 = vdwg.mxu0
    %v1079 = vmax.f32 %v1074, 0.0
    %v1080 = vpack.c.bf16 %v1079, %v1079
    %v1081 = vld [vmem:[#allocation10] sm:$0xff]
    %v1082 = vld [vmem:[#allocation10 + $0x8] sm:$0xff]
    %v1083 = vld [vmem:[#allocation10 + $0x10] sm:$0xff]
    %v1084 = vld [vmem:[#allocation10 + $0x18] sm:$0xff]
    %v1085 = vld [vmem:[#allocation10 + $0x20] sm:$0xff]
    %v1086 = vld [vmem:[#allocation10 + $0x28] sm:$0xff]
    %v1087 = vld [vmem:[#allocation10 + $0x30] sm:$0xff]
    %v1088 = vld [vmem:[#allocation10 + $0x38] sm:$0xff]
    %v1089 = vld [vmem:[#allocation10 + $0x40] sm:$0xff]
    %v1090 = vld [vmem:[#allocation10 + $0x48] sm:$0xff]
    %v1091 = vld [vmem:[#allocation10 + $0x50] sm:$0xff]
    %v1092 = vld [vmem:[#allocation10 + $0x58] sm:$0xff]
    %v1093 = vld [vmem:[#allocation10 + $0x60] sm:$0xff]
    %v1094 = vld [vmem:[#allocation10 + $0x68] sm:$0xff]
    %v1095 = vld [vmem:[#allocation10 + $0x70] sm:$0xff]
    %v1096 = vld [vmem:[#allocation10 + $0x78] sm:$0xff]
    %v1097 = vld [vmem:[#allocation10 + $0x80] sm:$0xff]
    %v1098 = vld [vmem:[#allocation10 + $0x88] sm:$0xff]
    %v1099 = vld [vmem:[#allocation10 + $0x90] sm:$0xff]
    %v1100 = vld [vmem:[#allocation10 + $0x98] sm:$0xff]
    %v1101 = vld [vmem:[#allocation10 + $0xa0] sm:$0xff]
    %v1102 = vld [vmem:[#allocation10 + $0xa8] sm:$0xff]
    %v1103 = vld [vmem:[#allocation10 + $0xb0] sm:$0xff]
    %v1104 = vld [vmem:[#allocation10 + $0xb8] sm:$0xff]
    %v1105 = vld [vmem:[#allocation10 + $0xc0] sm:$0xff]
    %v1106 = vld [vmem:[#allocation10 + $0xc8] sm:$0xff]
    %v1107 = vld [vmem:[#allocation10 + $0xd0] sm:$0xff]
    %v1108 = vld [vmem:[#allocation10 + $0xd8] sm:$0xff]
    %v1109 = vld [vmem:[#allocation10 + $0xe0] sm:$0xff]
    %v1110 = vld [vmem:[#allocation10 + $0xe8] sm:$0xff]
    %v1111 = vld [vmem:[#allocation10 + $0xf0] sm:$0xff]
    %v1112 = vld [vmem:[#allocation10 + $0xf8] sm:$0xff]
    %v1113 = vld [vmem:[#allocation10 + $0x100] sm:$0xff]
    %v1114 = vld [vmem:[#allocation10 + $0x108] sm:$0xff]
    %v1115 = vld [vmem:[#allocation10 + $0x110] sm:$0xff]
    %v1116 = vld [vmem:[#allocation10 + $0x118] sm:$0xff]
    %v1117 = vld [vmem:[#allocation10 + $0x120] sm:$0xff]
    %v1118 = vld [vmem:[#allocation10 + $0x128] sm:$0xff]
    %v1119 = vld [vmem:[#allocation10 + $0x130] sm:$0xff]
    %v1120 = vld [vmem:[#allocation10 + $0x138] sm:$0xff]
    %v1121 = vld [vmem:[#allocation10 + $0x140] sm:$0xff]
    %v1122 = vld [vmem:[#allocation10 + $0x148] sm:$0xff]
    %v1123 = vld [vmem:[#allocation10 + $0x150] sm:$0xff]
    %v1124 = vld [vmem:[#allocation10 + $0x158] sm:$0xff]
    %v1125 = vld [vmem:[#allocation10 + $0x160] sm:$0xff]
    %v1126 = vld [vmem:[#allocation10 + $0x168] sm:$0xff]
    %v1127 = vld [vmem:[#allocation10 + $0x170] sm:$0xff]
    %v1128 = vld [vmem:[#allocation10 + $0x178] sm:$0xff]
    %v1129 = vld [vmem:[#allocation10 + $0x180] sm:$0xff]
    %v1130 = vld [vmem:[#allocation10 + $0x188] sm:$0xff]
    %v1131 = vld [vmem:[#allocation10 + $0x190] sm:$0xff]
    %v1132 = vld [vmem:[#allocation10 + $0x198] sm:$0xff]
    %v1133 = vld [vmem:[#allocation10 + $0x1a0] sm:$0xff]
    %v1134 = vld [vmem:[#allocation10 + $0x1a8] sm:$0xff]
    %v1135 = vld [vmem:[#allocation10 + $0x1b0] sm:$0xff]
    %v1136 = vld [vmem:[#allocation10 + $0x1b8] sm:$0xff]
    %v1137 = vld [vmem:[#allocation10 + $0x1c0] sm:$0xff]
    %v1138 = vld [vmem:[#allocation10 + $0x1c8] sm:$0xff]
    %v1139 = vld [vmem:[#allocation10 + $0x1d0] sm:$0xff]
    %v1140 = vld [vmem:[#allocation10 + $0x1d8] sm:$0xff]
    %v1141 = vld [vmem:[#allocation10 + $0x1e0] sm:$0xff]
    %v1142 = vld [vmem:[#allocation10 + $0x1e8] sm:$0xff]
    %v1143 = vld [vmem:[#allocation10 + $0x1f0] sm:$0xff]
    %v1144 = vld [vmem:[#allocation10 + $0x1f8] sm:$0xff]
    %v1145 = vld [vmem:[%s9] sm:$0xff]
    %v1147 = vlaneseq
    %v1148 = vshrl.u32 %v1147, 7
    %v1149 = vsub.s32 0, %v1148
    %v1150 = vrot.slane %v1145, %v1149
    %v1151 = vlaneseq
    %v1152 = vshrl.u32 %v1151, 7
    %v1153 = vsub.s32 1, %v1152
    %v1154 = vrot.slane %v1145, %v1153
    %v1155 = vlaneseq
    %v1156 = vshrl.u32 %v1155, 7
    %v1157 = vsub.s32 2, %v1156
    %v1158 = vrot.slane %v1145, %v1157
    %v1159 = vlaneseq
    %v1160 = vshrl.u32 %v1159, 7
    %v1161 = vsub.s32 3, %v1160
    %v1162 = vrot.slane %v1145, %v1161
    %v1163 = vlaneseq
    %v1164 = vshrl.u32 %v1163, 7
    %v1165 = vsub.s32 4, %v1164
    %v1166 = vrot.slane %v1145, %v1165
    %v1167 = vlaneseq
    %v1168 = vshrl.u32 %v1167, 7
    %v1169 = vsub.s32 5, %v1168
    %v1170 = vrot.slane %v1145, %v1169
    %v1171 = vlaneseq
    %v1172 = vshrl.u32 %v1171, 7
    %v1173 = vsub.s32 6, %v1172
    %v1174 = vrot.slane %v1145, %v1173
    %v1175 = vlaneseq
    %v1176 = vshrl.u32 %v1175, 7
    %v1177 = vsub.s32 7, %v1176
    %v1178 = vrot.slane %v1145, %v1177
    %v1251 = vunpack.c.l.b16 %v1081
    %v1252 = vunpack.c.h.b16 %v1081
    %v1253 = vunpack.c.l.b16 %v1082
    %v1254 = vunpack.c.h.b16 %v1082
    %v1255 = vunpack.c.l.b16 %v1083
    %v1256 = vunpack.c.h.b16 %v1083
    %v1257 = vunpack.c.l.b16 %v1084
    %v1258 = vunpack.c.h.b16 %v1084
    %v1259 = vunpack.c.l.b16 %v1085
    %v1260 = vunpack.c.h.b16 %v1085
    %v1261 = vunpack.c.l.b16 %v1086
    %v1262 = vunpack.c.h.b16 %v1086
    %v1263 = vunpack.c.l.b16 %v1087
    %v1264 = vunpack.c.h.b16 %v1087
    %v1265 = vunpack.c.l.b16 %v1088
    %v1266 = vunpack.c.h.b16 %v1088
    %v1267 = vunpack.c.l.b16 %v1089
    %v1268 = vunpack.c.h.b16 %v1089
    %v1269 = vunpack.c.l.b16 %v1090
    %v1270 = vunpack.c.h.b16 %v1090
    %v1271 = vunpack.c.l.b16 %v1091
    %v1272 = vunpack.c.h.b16 %v1091
    %v1273 = vunpack.c.l.b16 %v1092
    %v1274 = vunpack.c.h.b16 %v1092
    %v1275 = vunpack.c.l.b16 %v1093
    %v1276 = vunpack.c.h.b16 %v1093
    %v1277 = vunpack.c.l.b16 %v1094
    %v1278 = vunpack.c.h.b16 %v1094
    %v1279 = vunpack.c.l.b16 %v1095
    %v1280 = vunpack.c.h.b16 %v1095
    %v1281 = vunpack.c.l.b16 %v1096
    %v1282 = vunpack.c.h.b16 %v1096
    %v1283 = vunpack.c.l.b16 %v1097
    %v1284 = vunpack.c.h.b16 %v1097
    %v1285 = vunpack.c.l.b16 %v1098
    %v1286 = vunpack.c.h.b16 %v1098
    %v1287 = vunpack.c.l.b16 %v1099
    %v1288 = vunpack.c.h.b16 %v1099
    %v1289 = vunpack.c.l.b16 %v1100
    %v1290 = vunpack.c.h.b16 %v1100
    %v1291 = vunpack.c.l.b16 %v1101
    %v1292 = vunpack.c.h.b16 %v1101
    %v1293 = vunpack.c.l.b16 %v1102
    %v1294 = vunpack.c.h.b16 %v1102
    %v1295 = vunpack.c.l.b16 %v1103
    %v1296 = vunpack.c.h.b16 %v1103
    %v1297 = vunpack.c.l.b16 %v1104
    %v1298 = vunpack.c.h.b16 %v1104
    %v1299 = vunpack.c.l.b16 %v1105
    %v1300 = vunpack.c.h.b16 %v1105
    %v1301 = vunpack.c.l.b16 %v1106
    %v1302 = vunpack.c.h.b16 %v1106
    %v1303 = vunpack.c.l.b16 %v1107
    %v1304 = vunpack.c.h.b16 %v1107
    %v1305 = vunpack.c.l.b16 %v1108
    %v1306 = vunpack.c.h.b16 %v1108
    %v1307 = vunpack.c.l.b16 %v1109
    %v1308 = vunpack.c.h.b16 %v1109
    %v1309 = vunpack.c.l.b16 %v1110
    %v1310 = vunpack.c.h.b16 %v1110
    %v1311 = vunpack.c.l.b16 %v1111
    %v1312 = vunpack.c.h.b16 %v1111
    %v1313 = vunpack.c.l.b16 %v1112
    %v1314 = vunpack.c.h.b16 %v1112
    %v1315 = vunpack.c.l.b16 %v1113
    %v1316 = vunpack.c.h.b16 %v1113
    %v1317 = vunpack.c.l.b16 %v1114
    %v1318 = vunpack.c.h.b16 %v1114
    %v1319 = vunpack.c.l.b16 %v1115
    %v1320 = vunpack.c.h.b16 %v1115
    %v1321 = vunpack.c.l.b16 %v1116
    %v1322 = vunpack.c.h.b16 %v1116
    %v1323 = vunpack.c.l.b16 %v1117
    %v1324 = vunpack.c.h.b16 %v1117
    %v1325 = vunpack.c.l.b16 %v1118
    %v1326 = vunpack.c.h.b16 %v1118
    %v1327 = vunpack.c.l.b16 %v1119
    %v1328 = vunpack.c.h.b16 %v1119
    %v1329 = vunpack.c.l.b16 %v1120
    %v1330 = vunpack.c.h.b16 %v1120
    %v1331 = vunpack.c.l.b16 %v1121
    %v1332 = vunpack.c.h.b16 %v1121
    %v1333 = vunpack.c.l.b16 %v1122
    %v1334 = vunpack.c.h.b16 %v1122
    %v1335 = vunpack.c.l.b16 %v1123
    %v1336 = vunpack.c.h.b16 %v1123
    %v1337 = vunpack.c.l.b16 %v1124
    %v1338 = vunpack.c.h.b16 %v1124
    %v1339 = vunpack.c.l.b16 %v1125
    %v1340 = vunpack.c.h.b16 %v1125
    %v1341 = vunpack.c.l.b16 %v1126
    %v1342 = vunpack.c.h.b16 %v1126
    %v1343 = vunpack.c.l.b16 %v1127
    %v1344 = vunpack.c.h.b16 %v1127
    %v1345 = vunpack.c.l.b16 %v1128
    %v1346 = vunpack.c.h.b16 %v1128
    %v1347 = vunpack.c.l.b16 %v1129
    %v1348 = vunpack.c.h.b16 %v1129
    %v1349 = vunpack.c.l.b16 %v1130
    %v1350 = vunpack.c.h.b16 %v1130
    %v1351 = vunpack.c.l.b16 %v1131
    %v1352 = vunpack.c.h.b16 %v1131
    %v1353 = vunpack.c.l.b16 %v1132
    %v1354 = vunpack.c.h.b16 %v1132
    %v1355 = vunpack.c.l.b16 %v1133
    %v1356 = vunpack.c.h.b16 %v1133
    %v1357 = vunpack.c.l.b16 %v1134
    %v1358 = vunpack.c.h.b16 %v1134
    %v1359 = vunpack.c.l.b16 %v1135
    %v1360 = vunpack.c.h.b16 %v1135
    %v1361 = vunpack.c.l.b16 %v1136
    %v1362 = vunpack.c.h.b16 %v1136
    %v1363 = vunpack.c.l.b16 %v1137
    %v1364 = vunpack.c.h.b16 %v1137
    %v1365 = vunpack.c.l.b16 %v1138
    %v1366 = vunpack.c.h.b16 %v1138
    %v1367 = vunpack.c.l.b16 %v1139
    %v1368 = vunpack.c.h.b16 %v1139
    %v1369 = vunpack.c.l.b16 %v1140
    %v1370 = vunpack.c.h.b16 %v1140
    %v1371 = vunpack.c.l.b16 %v1141
    %v1372 = vunpack.c.h.b16 %v1141
    %v1373 = vunpack.c.l.b16 %v1142
    %v1374 = vunpack.c.h.b16 %v1142
    %v1375 = vunpack.c.l.b16 %v1143
    %v1376 = vunpack.c.h.b16 %v1143
    %v1377 = vunpack.c.l.b16 %v1144
    %v1378 = vunpack.c.h.b16 %v1144
    %v1379 = vpack.c.b16 %v1259, %v1251
    %v1380 = vpack.c.b16 %v1260, %v1252
    %v1381 = vpack.c.b16 %v1261, %v1253
    %v1382 = vpack.c.b16 %v1262, %v1254
    %v1383 = vpack.c.b16 %v1263, %v1255
    %v1384 = vpack.c.b16 %v1264, %v1256
    %v1385 = vpack.c.b16 %v1265, %v1257
    %v1386 = vpack.c.b16 %v1266, %v1258
    %v1387 = vpack.c.b16 %v1275, %v1267
    %v1388 = vpack.c.b16 %v1276, %v1268
    %v1389 = vpack.c.b16 %v1277, %v1269
    %v1390 = vpack.c.b16 %v1278, %v1270
    %v1391 = vpack.c.b16 %v1279, %v1271
    %v1392 = vpack.c.b16 %v1280, %v1272
    %v1393 = vpack.c.b16 %v1281, %v1273
    %v1394 = vpack.c.b16 %v1282, %v1274
    %v1395 = vpack.c.b16 %v1291, %v1283
    %v1396 = vpack.c.b16 %v1292, %v1284
    %v1397 = vpack.c.b16 %v1293, %v1285
    %v1398 = vpack.c.b16 %v1294, %v1286
    %v1399 = vpack.c.b16 %v1295, %v1287
    %v1400 = vpack.c.b16 %v1296, %v1288
    %v1401 = vpack.c.b16 %v1297, %v1289
    %v1402 = vpack.c.b16 %v1298, %v1290
    %v1403 = vpack.c.b16 %v1307, %v1299
    %v1404 = vpack.c.b16 %v1308, %v1300
    %v1405 = vpack.c.b16 %v1309, %v1301
    %v1406 = vpack.c.b16 %v1310, %v1302
    %v1407 = vpack.c.b16 %v1311, %v1303
    %v1408 = vpack.c.b16 %v1312, %v1304
    %v1409 = vpack.c.b16 %v1313, %v1305
    %v1410 = vpack.c.b16 %v1314, %v1306
    %v1411 = vpack.c.b16 %v1323, %v1315
    %v1412 = vpack.c.b16 %v1324, %v1316
    %v1413 = vpack.c.b16 %v1325, %v1317
    %v1414 = vpack.c.b16 %v1326, %v1318
    %v1415 = vpack.c.b16 %v1327, %v1319
    %v1416 = vpack.c.b16 %v1328, %v1320
    %v1417 = vpack.c.b16 %v1329, %v1321
    %v1418 = vpack.c.b16 %v1330, %v1322
    %v1419 = vpack.c.b16 %v1339, %v1331
    %v1420 = vpack.c.b16 %v1340, %v1332
    %v1421 = vpack.c.b16 %v1341, %v1333
    %v1422 = vpack.c.b16 %v1342, %v1334
    %v1423 = vpack.c.b16 %v1343, %v1335
    %v1424 = vpack.c.b16 %v1344, %v1336
    %v1425 = vpack.c.b16 %v1345, %v1337
    %v1426 = vpack.c.b16 %v1346, %v1338
    %v1427 = vpack.c.b16 %v1355, %v1347
    %v1428 = vpack.c.b16 %v1356, %v1348
    %v1429 = vpack.c.b16 %v1357, %v1349
    %v1430 = vpack.c.b16 %v1358, %v1350
    %v1431 = vpack.c.b16 %v1359, %v1351
    %v1432 = vpack.c.b16 %v1360, %v1352
    %v1433 = vpack.c.b16 %v1361, %v1353
    %v1434 = vpack.c.b16 %v1362, %v1354
    %v1435 = vpack.c.b16 %v1371, %v1363
    %v1436 = vpack.c.b16 %v1372, %v1364
    %v1437 = vpack.c.b16 %v1373, %v1365
    %v1438 = vpack.c.b16 %v1374, %v1366
    %v1439 = vpack.c.b16 %v1375, %v1367
    %v1440 = vpack.c.b16 %v1376, %v1368
    %v1441 = vpack.c.b16 %v1377, %v1369
    %v1442 = vpack.c.b16 %v1378, %v1370
    %1507 = vmatprep.subr.bf16.mxu0 %v1380
    %1508 = vmatpush1.bf16.msra.mxu0 %v1379
    %1509 = vmatprep.subr.bf16.mxu0 %v1388
    %1510 = vmatpush1.bf16.msra.mxu0 %v1387
    %1511 = vmatprep.subr.bf16.mxu0 %v1396
    %1512 = vmatpush1.bf16.msra.mxu0 %v1395
    %1513 = vmatprep.subr.bf16.mxu0 %v1404
    %1514 = vmatpush1.bf16.msra.mxu0 %v1403
    %1515 = vmatprep.subr.bf16.mxu0 %v1412
    %1516 = vmatpush1.bf16.msra.mxu0 %v1411
    %1517 = vmatprep.subr.bf16.mxu0 %v1420
    %1518 = vmatpush1.bf16.msra.mxu0 %v1419
    %1519 = vmatprep.subr.bf16.mxu0 %v1428
    %1520 = vmatpush1.bf16.msra.mxu0 %v1427
    %1521 = vmatprep.subr.bf16.mxu0 %v1436
    %1522 = vmatpush1.bf16.msra.mxu0 %v1435
    %1523 = vmatprep.subr.bf16.mxu0 0
    %1524 = vmatpush1.bf16.msra.mxu0 0
    %1525 = vmatprep.subr.bf16.mxu0 0
    %1526 = vmatpush1.bf16.msra.mxu0 0
    %1527 = vmatprep.subr.bf16.mxu0 0
    %1528 = vmatpush1.bf16.msra.mxu0 0
    %1529 = vmatprep.subr.bf16.mxu0 0
    %1530 = vmatpush1.bf16.msra.mxu0 0
    %1531 = vmatprep.subr.bf16.mxu0 0
    %1532 = vmatpush1.bf16.msra.mxu0 0
    %1533 = vmatprep.subr.bf16.mxu0 0
    %1534 = vmatpush1.bf16.msra.mxu0 0
    %1535 = vmatprep.subr.bf16.mxu0 0
    %1536 = vmatpush1.bf16.msra.mxu0 0
    %1537 = vmatprep.subr.bf16.mxu0 0
    %1538 = vmatpush1.bf16.msra.mxu0 0
    %1539 = vmatprep.mubr.bf16.mxu0 0
    %1540 = vmatmul.mubr.bf16.gmra.mrb[0].mxu0 %v1080
    %v1541 = vpop.f32.mrb[0].mxu0
    %v1542 = vadd.f32 %v1150, %v1541
    %v1543 = vpop.f32.mrb[0].mxu0
    %v1544 = vadd.f32 %v1154, %v1543
    %v1545 = vpop.f32.mrb[0].mxu0
    %v1546 = vpop.f32.mrb[0].mxu0
    %1547 = vdwg.mxu0
    %1548 = vmatprep.subr.bf16.mxu0 %v1382
    %1549 = vmatpush1.bf16.msra.mxu0 %v1381
    %1550 = vmatprep.subr.bf16.mxu0 %v1390
    %1551 = vmatpush1.bf16.msra.mxu0 %v1389
    %1552 = vmatprep.subr.bf16.mxu0 %v1398
    %1553 = vmatpush1.bf16.msra.mxu0 %v1397
    %1554 = vmatprep.subr.bf16.mxu0 %v1406
    %1555 = vmatpush1.bf16.msra.mxu0 %v1405
    %1556 = vmatprep.subr.bf16.mxu0 %v1414
    %1557 = vmatpush1.bf16.msra.mxu0 %v1413
    %1558 = vmatprep.subr.bf16.mxu0 %v1422
    %1559 = vmatpush1.bf16.msra.mxu0 %v1421
    %1560 = vmatprep.subr.bf16.mxu0 %v1430
    %1561 = vmatpush1.bf16.msra.mxu0 %v1429
    %1562 = vmatprep.subr.bf16.mxu0 %v1438
    %1563 = vmatpush1.bf16.msra.mxu0 %v1437
    %1564 = vmatprep.subr.bf16.mxu0 0
    %1565 = vmatpush1.bf16.msra.mxu0 0
    %1566 = vmatprep.subr.bf16.mxu0 0
    %1567 = vmatpush1.bf16.msra.mxu0 0
    %1568 = vmatprep.subr.bf16.mxu0 0
    %1569 = vmatpush1.bf16.msra.mxu0 0
    %1570 = vmatprep.subr.bf16.mxu0 0
    %1571 = vmatpush1.bf16.msra.mxu0 0
    %1572 = vmatprep.subr.bf16.mxu0 0
    %1573 = vmatpush1.bf16.msra.mxu0 0
    %1574 = vmatprep.subr.bf16.mxu0 0
    %1575 = vmatpush1.bf16.msra.mxu0 0
    %1576 = vmatprep.subr.bf16.mxu0 0
    %1577 = vmatpush1.bf16.msra.mxu0 0
    %1578 = vmatprep.subr.bf16.mxu0 0
    %1579 = vmatpush1.bf16.msra.mxu0 0
    %1580 = vmatprep.mubr.bf16.mxu0 0
    %1581 = vmatmul.mubr.bf16.gmra.mrb[0].mxu0 %v1080
    %v1582 = vpop.f32.mrb[0].mxu0
    %v1583 = vadd.f32 %v1158, %v1582
    %v1584 = vpop.f32.mrb[0].mxu0
    %v1585 = vadd.f32 %v1162, %v1584
    %v1586 = vpop.f32.mrb[0].mxu0
    %v1587 = vpop.f32.mrb[0].mxu0
    %1588 = vdwg.mxu0
    %1589 = vmatprep.subr.bf16.mxu0 %v1384
    %1590 = vmatpush1.bf16.msra.mxu0 %v1383
    %1591 = vmatprep.subr.bf16.mxu0 %v1392
    %1592 = vmatpush1.bf16.msra.mxu0 %v1391
    %1593 = vmatprep.subr.bf16.mxu0 %v1400
    %1594 = vmatpush1.bf16.msra.mxu0 %v1399
    %1595 = vmatprep.subr.bf16.mxu0 %v1408
    %1596 = vmatpush1.bf16.msra.mxu0 %v1407
    %1597 = vmatprep.subr.bf16.mxu0 %v1416
    %1598 = vmatpush1.bf16.msra.mxu0 %v1415
    %1599 = vmatprep.subr.bf16.mxu0 %v1424
    %1600 = vmatpush1.bf16.msra.mxu0 %v1423
    %1601 = vmatprep.subr.bf16.mxu0 %v1432
    %1602 = vmatpush1.bf16.msra.mxu0 %v1431
    %1603 = vmatprep.subr.bf16.mxu0 %v1440
    %1604 = vmatpush1.bf16.msra.mxu0 %v1439
    %1605 = vmatprep.subr.bf16.mxu0 0
    %1606 = vmatpush1.bf16.msra.mxu0 0
    %1607 = vmatprep.subr.bf16.mxu0 0
    %1608 = vmatpush1.bf16.msra.mxu0 0
    %1609 = vmatprep.subr.bf16.mxu0 0
    %1610 = vmatpush1.bf16.msra.mxu0 0
    %1611 = vmatprep.subr.bf16.mxu0 0
    %1612 = vmatpush1.bf16.msra.mxu0 0
    %1613 = vmatprep.subr.bf16.mxu0 0
    %1614 = vmatpush1.bf16.msra.mxu0 0
    %1615 = vmatprep.subr.bf16.mxu0 0
    %1616 = vmatpush1.bf16.msra.mxu0 0
    %1617 = vmatprep.subr.bf16.mxu0 0
    %1618 = vmatpush1.bf16.msra.mxu0 0
    %1619 = vmatprep.subr.bf16.mxu0 0
    %1620 = vmatpush1.bf16.msra.mxu0 0
    %1621 = vmatprep.mubr.bf16.mxu0 0
    %1622 = vmatmul.mubr.bf16.gmra.mrb[0].mxu0 %v1080
    %v1623 = vpop.f32.mrb[0].mxu0
    %v1624 = vadd.f32 %v1166, %v1623
    %v1625 = vpop.f32.mrb[0].mxu0
    %v1626 = vadd.f32 %v1170, %v1625
    %v1627 = vpop.f32.mrb[0].mxu0
    %v1628 = vpop.f32.mrb[0].mxu0
    %1629 = vdwg.mxu0
    %1630 = vmatprep.subr.bf16.mxu0 %v1386
    %1631 = vmatpush1.bf16.msra.mxu0 %v1385
    %1632 = vmatprep.subr.bf16.mxu0 %v1394
    %1633 = vmatpush1.bf16.msra.mxu0 %v1393
    %1634 = vmatprep.subr.bf16.mxu0 %v1402
    %1635 = vmatpush1.bf16.msra.mxu0 %v1401
    %1636 = vmatprep.subr.bf16.mxu0 %v1410
    %1637 = vmatpush1.bf16.msra.mxu0 %v1409
    %1638 = vmatprep.subr.bf16.mxu0 %v1418
    %1639 = vmatpush1.bf16.msra.mxu0 %v1417
    %1640 = vmatprep.subr.bf16.mxu0 %v1426
    %1641 = vmatpush1.bf16.msra.mxu0 %v1425
    %1642 = vmatprep.subr.bf16.mxu0 %v1434
    %1643 = vmatpush1.bf16.msra.mxu0 %v1433
    %1644 = vmatprep.subr.bf16.mxu0 %v1442
    %1645 = vmatpush1.bf16.msra.mxu0 %v1441
    %1646 = vmatprep.subr.bf16.mxu0 0
    %1647 = vmatpush1.bf16.msra.mxu0 0
    %1648 = vmatprep.subr.bf16.mxu0 0
    %1649 = vmatpush1.bf16.msra.mxu0 0
    %1650 = vmatprep.subr.bf16.mxu0 0
    %1651 = vmatpush1.bf16.msra.mxu0 0
    %1652 = vmatprep.subr.bf16.mxu0 0
    %1653 = vmatpush1.bf16.msra.mxu0 0
    %1654 = vmatprep.subr.bf16.mxu0 0
    %1655 = vmatpush1.bf16.msra.mxu0 0
    %1656 = vmatprep.subr.bf16.mxu0 0
    %1657 = vmatpush1.bf16.msra.mxu0 0
    %1658 = vmatprep.subr.bf16.mxu0 0
    %1659 = vmatpush1.bf16.msra.mxu0 0
    %1660 = vmatprep.subr.bf16.mxu0 0
    %1661 = vmatpush1.bf16.msra.mxu0 0
    %1662 = vmatprep.mubr.bf16.mxu0 0
    %1663 = vmatmul.mubr.bf16.gmra.mrb[0].mxu0 %v1080
    %v1664 = vpop.f32.mrb[0].mxu0
    %v1665 = vadd.f32 %v1174, %v1664
    %v1666 = vpop.f32.mrb[0].mxu0
    %v1667 = vadd.f32 %v1178, %v1666
    %v1668 = vpop.f32.mrb[0].mxu0
    %v1669 = vpop.f32.mrb[0].mxu0
    %1670 = vdwg.mxu0
    %v1671 = vxor.u32 %v1542, 2147483648
    %v1672 = vxor.u32 %v1544, 2147483648
    %v1673 = vxor.u32 %v1583, 2147483648
    %v1674 = vxor.u32 %v1585, 2147483648
    %v1675 = vxor.u32 %v1624, 2147483648
    %v1676 = vxor.u32 %v1626, 2147483648
    %v1677 = vxor.u32 %v1665, 2147483648
    %v1678 = vxor.u32 %v1667, 2147483648
    %v1679 = vmul.f32 %v1671, 1.442695
    %v1680 = vpow.pop %v1679
    %v1681 = vmul.f32 %v1672, 1.442695
    %v1682 = vpow.pop %v1681
    %v1683 = vmul.f32 %v1673, 1.442695
    %v1684 = vpow.pop %v1683
    %v1685 = vmul.f32 %v1674, 1.442695
    %v1686 = vpow.pop %v1685
    %v1687 = vmul.f32 %v1675, 1.442695
    %v1688 = vpow.pop %v1687
    %v1689 = vmul.f32 %v1676, 1.442695
    %v1690 = vpow.pop %v1689
    %v1691 = vmul.f32 %v1677, 1.442695
    %v1692 = vpow.pop %v1691
    %v1693 = vmul.f32 %v1678, 1.442695
    %v1694 = vpow.pop %v1693
    %v1695 = vadd.f32 %v1680, 1.0
    %v1696 = vadd.f32 %v1682, 1.0
    %v1697 = vadd.f32 %v1684, 1.0
    %v1698 = vadd.f32 %v1686, 1.0
    %v1699 = vadd.f32 %v1688, 1.0
    %v1700 = vadd.f32 %v1690, 1.0
    %v1701 = vadd.f32 %v1692, 1.0
    %v1702 = vadd.f32 %v1694, 1.0
    %v1703 = vrcp.pop %v1695
    %v1704 = vmul.f32 1.0, %v1703
    %v1705 = vrcp.pop %v1696
    %v1706 = vmul.f32 1.0, %v1705
    %v1707 = vrcp.pop %v1697
    %v1708 = vmul.f32 1.0, %v1707
    %v1709 = vrcp.pop %v1698
    %v1710 = vmul.f32 1.0, %v1709
    %v1711 = vrcp.pop %v1699
    %v1712 = vmul.f32 1.0, %v1711
    %v1713 = vrcp.pop %v1700
    %v1714 = vmul.f32 1.0, %v1713
    %v1715 = vrcp.pop %v1701
    %v1716 = vmul.f32 1.0, %v1715
    %v1717 = vrcp.pop %v1702
    %v1718 = vmul.f32 1.0, %v1717
    %v1719 = vmax.f32 %v1704, 3.8e-44
    %v1720 = vmax.f32 %v1706, 3.8e-44
    %v1721 = vmax.f32 %v1708, 3.8e-44
    %v1722 = vmax.f32 %v1710, 3.8e-44
    %v1723 = vmax.f32 %v1712, 3.8e-44
    %v1724 = vmax.f32 %v1714, 3.8e-44
    %v1725 = vmax.f32 %v1716, 3.8e-44
    %v1726 = vmax.f32 %v1718, 3.8e-44
    %v1727 = vmin.f32 %v1719, 1.0
    %v1728 = vmin.f32 %v1720, 1.0
    %v1729 = vmin.f32 %v1721, 1.0
    %v1730 = vmin.f32 %v1722, 1.0
    %v1731 = vmin.f32 %v1723, 1.0
    %v1732 = vmin.f32 %v1724, 1.0
    %v1733 = vmin.f32 %v1725, 1.0
    %v1734 = vmin.f32 %v1726, 1.0
    %v1743 = vcombine.low %v1727, %v1728
    %v1744 = vcombine.low %v1729, %v1730
    %v1746 = vunpack.c.l.s4 1983009808
    %v1747 = vunpack.c.0.s8 %v1746
    %v1748 = vlaneseq
    %v1749 = vshrl.u32 %v1748, 7
    %v1750 = vsub.s32 %v1747, %v1749
    %v1751 = vrot.slane %v1743, %v1750
    %v1753 = vunpack.c.l.s4 1983009808
    %v1754 = vunpack.c.0.s8 %v1753
    %v1755 = vlaneseq
    %v1756 = vshrl.u32 %v1755, 7
    %v1757 = vsub.s32 %v1754, %v1756
    %v1758 = vrot.slane %v1744, %v1757
    %v1759 = vcombine.low %v1751, %v1758
    %v1760 = vcombine.low %v1731, %v1732
    %v1761 = vcombine.low %v1733, %v1734
    %v1763 = vunpack.c.l.s4 1983009808
    %v1764 = vunpack.c.0.s8 %v1763
    %v1765 = vlaneseq
    %v1766 = vshrl.u32 %v1765, 7
    %v1767 = vsub.s32 %v1764, %v1766
    %v1768 = vrot.slane %v1760, %v1767
    %v1770 = vunpack.c.l.s4 1983009808
    %v1771 = vunpack.c.0.s8 %v1770
    %v1772 = vlaneseq
    %v1773 = vshrl.u32 %v1772, 7
    %v1774 = vsub.s32 %v1771, %v1773
    %v1775 = vrot.slane %v1761, %v1774
    %v1776 = vcombine.low %v1768, %v1775
    %1779 = vst [vmem:[#allocation11] sm:$0xff] %v1759
    %1780 = vst [vmem:[#allocation11 + $0x8] sm:$0xff] %v1776
    // Predicated region
    $region62: #{tpu_custom_call.1} parent=1 // pred_check
      _
    $region63: #{tpu_custom_call.1} parent=1 // pred_check_branch
      %1782 = sbr.rel (0) target = $region65
    $region64: #{tpu_custom_call.1} parent=1 // pred_region
      %s1784 = ssub.s32 256, 256
      %1785 = vsyncadd [#allocation4], %s1784
      %s1787 = sshll.u32 [#allocation11], 4
      %s1788 = int_to_ptr.vmem [resolvable:$true] %s1787
      %1790 = dma.vmem_to_hbm [thread:$0]  %s1788, 256, %s10, [#allocation4]
    $region65: #{tpu_custom_call.1} parent=1 // pred_fallthru
      _
    // Predicated region
    $region66: #{tpu_custom_call.1} parent=1 // pred_check
      _
    $region67: #{tpu_custom_call.1} parent=1 // pred_check_branch
      %1792 = sbr.rel (0) target = $region69
    $region68: #{tpu_custom_call.1} parent=1 // pred_region
      %s1794 = ssub.s32 32, 32
      %1795 = vsyncadd [#allocation13], %s1794
      %s1797 = sshll.u32 [#allocation12], 4
      %s1798 = int_to_ptr.vmem [resolvable:$true] %s1797
      %1800 = dma.vmem_to_hbm [thread:$0]  %s1798, 32, %s11, [#allocation13]
    $region69: #{tpu_custom_call.1} parent=1 // pred_fallthru
      _
    // Predicated region
    $region70: #{tpu_custom_call.1} parent=1 // pred_check
      _
    $region71: #{tpu_custom_call.1} parent=1 // pred_check_branch
      %1802 = sbr.rel (0) target = $region73
    $region72: #{tpu_custom_call.1} parent=1 // pred_region
      %1803 = dma.done [#allocation4], 256
    $region73: #{tpu_custom_call.1} parent=1 // pred_fallthru
      _
    // Predicated region
    $region74: #{tpu_custom_call.1} parent=1 // pred_check
      _
    $region75: #{tpu_custom_call.1} parent=1 // pred_check_branch
      %1805 = sbr.rel (0) target = $region77
    $region76: #{tpu_custom_call.1} parent=1 // pred_region
      %1806 = dma.done [#allocation13], 32
    $region77: #{tpu_custom_call.1} parent=1 // pred_fallthru
      _
    %1807 = vsyncpa [#allocation3], 1
    %1808 = vsyncpa [#allocation6], 1
    %1809 = vsyncpa [#allocation9], 1
    %1810 = vsyncpa [#allocation4], 1
    %1811 = vsyncpa [#allocation13], 1

</llo_original>
